<compile_context>
chip_gen: v5e
topology: v5e:2x2
jax: 0.10.0
libtpu: 0.0.40
codegen_flags: <defaults>
</compile_context>

<pallas_src>
import functools

import jax
import jax.numpy as jnp
from jax.experimental import pallas as pl
from jax.experimental.pallas import tpu as pltpu


def moe_kernel(*refs, S, D, E, H, groups):
    """groups: tuple of (kv_source_index, (expert_idx, ...)) for non-empty kv groups."""
    n_groups = len(groups)
    x_ref, wq_ref, bq_ref = refs[0], refs[1], refs[2]
    kv_refs = refs[3:3 + 2 * n_groups]
    (ow_ref, ob_ref, fcw_ref, fcb_ref,
     gw_ref, gb_ref, cw_ref, cb_ref, out_ref) = refs[3 + 2 * n_groups:]

    TB = x_ref.shape[0]                              # per-block batch
    hd = D // H
    bf16, f32 = jnp.bfloat16, jnp.float32

    def mm(a, b):
        # bf16 MXU inputs, f32 accumulation.
        return jnp.dot(a.astype(bf16), b.astype(bf16), preferred_element_type=f32)

    xb = x_ref[...]                                  # (TB, 3, S, D)
    wt = xb[:, 0]                                    # (TB, S, D)
    wt_flat = wt.reshape(TB * S, D)

    # ---- gate: f32 matmul + exact softmax (gate scales every expert output) ----
    wt_mean = jnp.mean(wt, axis=1)                   # (TB, D)
    g = jnp.dot(wt_mean, gw_ref[...], preferred_element_type=f32) + gb_ref[...]
    g = g - jnp.max(g, axis=-1, keepdims=True)
    g = jnp.exp(g)
    gate = g / jnp.sum(g, axis=-1, keepdims=True)    # (TB, E)

    # ---- fused Q projection for ALL experts (1/sqrt(hd) folded into the weights) ----
    q_all = mm(wt_flat, wq_ref[...]) + bq_ref[...]   # (TB*S, E*D)

    # ---- fused K/V projection, one matmul per KV source ----
    kv_projs = []
    for gi, (src, members) in enumerate(groups):
        kv_flat = xb[:, 1 + src].reshape(TB * S, D)  # mut (src=0) or diff (src=1)
        kv_projs.append(mm(kv_flat, kv_refs[2 * gi][...]) + kv_refs[2 * gi + 1][...])

    # map expert -> (group index, position within its fused K/V projection)
    e_map = {}
    for gi, (src, members) in enumerate(groups):
        for pos, e in enumerate(members):
            e_map[e] = (gi, pos)

    # ---- stack every (expert, head) into one leading batch dim: (E*H*TB, S, hd) ----
    q_pieces, k_pieces, v_pieces = [], [], []
    for e in range(E):
        gi, pos = e_map[e]
        kvp = kv_projs[gi]
        k_off = pos * 2 * D
        v_off = pos * 2 * D + D
        for h in range(H):
            lo, hi = h * hd, (h + 1) * hd
            q_pieces.append(q_all[:, e * D + lo:e * D + hi].reshape(TB, S, hd))
            k_pieces.append(kvp[:, k_off + lo:k_off + hi].reshape(TB, S, hd))
            v_pieces.append(kvp[:, v_off + lo:v_off + hi].reshape(TB, S, hd))
    qb = jnp.concatenate(q_pieces, axis=0).astype(bf16)   # (E*H*TB, S, hd)
    kb = jnp.concatenate(k_pieces, axis=0).astype(bf16)
    vb = jnp.concatenate(v_pieces, axis=0)                 # f32: only used post-pooling

    # ---- one batched QK^T + softmax for all experts and heads ----
    att = jnp.einsum("bqd,bkd->bqk", qb, kb,
                     preferred_element_type=f32)            # (E*H*TB, S, S)
    att = att - jnp.max(att, axis=-1, keepdims=True)
    p = jnp.exp(att)
    p = p * pl.reciprocal(jnp.sum(p, axis=-1, keepdims=True), approx=True)

    # ---- pool probabilities over the query axis BEFORE PV (mean & matmul commute) ----
    p_mean = jnp.mean(p, axis=1, keepdims=True)             # (E*H*TB, 1, S)
    pooled = jnp.einsum("bqk,bkd->bqd", p_mean, vb,
                        preferred_element_type=f32)          # (E*H*TB, 1, hd), f32 exact

    # ---- regroup heads -> per-expert pooled context, stack experts: (E, TB, D) ----
    pooled_experts = []
    for e in range(E):
        heads = [pooled[(e * H + h) * TB:(e * H + h + 1) * TB, 0, :] for h in range(H)]
        pooled_experts.append(jnp.concatenate(heads, axis=-1))      # (TB, D)
    pooled_all = jnp.stack(pooled_experts, axis=0)                   # (E, TB, D)

    # ---- batched expert epilogue: one out_proj batch-matmul + one fc batch-matmul ----
    eo = jnp.einsum("ebd,edf->ebf", pooled_all.astype(bf16), ow_ref[...].astype(bf16),
                    preferred_element_type=f32) + ob_ref[...]        # (E, TB, D)
    ef = jnp.einsum("ebd,edf->ebf", eo.astype(bf16), fcw_ref[...].astype(bf16),
                    preferred_element_type=f32) + fcb_ref[...]       # (E, TB, D)

    # ---- gate-weighted fusion (E is tiny & static; keep in f32 for accuracy) ----
    fused = gate[:, 0:1] * ef[0]
    for e in range(1, E):
        fused = fused + gate[:, e:e + 1] * ef[e]

    # ---- classifier (lane-padded output, dense store) ----
    logits = mm(fused, cw_ref[...]) + cb_ref[...]                    # (TB, C_pad)
    out_ref[...] = logits.astype(out_ref.dtype)


def mixture_of_experts(x, params, *, num_heads, block_b=None):
    B, n_streams, S, D = x.shape
    E = params["in_proj_w"].shape[0]
    C = params["cls_w"].shape[0]
    n_kv = n_streams - 1                     # kv sources: [mut, diff]
    H = num_heads
    hd = D // H
    f32 = jnp.float32

    ipw, ipb = params["in_proj_w"], params["in_proj_b"]
    scale = 1.0 / float(hd) ** 0.5

    # ---- wrapper-side weight layout prep (pure layout plumbing, done once) ----
    # Q weights for all experts stacked column-wise, with 1/sqrt(hd) folded in.
    wq_all = jnp.concatenate([ipw[e, :D, :].T for e in range(E)], axis=1) * scale
    bq_all = (jnp.concatenate([ipb[e, :D] for e in range(E)]) * scale)[None, :]

    # Group experts by which kv source they read (e % n_kv), fuse their K/V weights.
    groups, kv_args = [], []
    for src in range(n_kv):
        members = tuple(e for e in range(E) if e % n_kv == src)
        if not members:
            continue
        groups.append((src, members))
        w_cols = [ipw[e, D:3 * D, :].T for e in members]    # [D, 2D]: K cols then V cols
        b_cols = [ipb[e, D:3 * D] for e in members]
        kv_args.append(jnp.concatenate(w_cols, axis=1))     # [D, 2*D*len(members)]
        kv_args.append(jnp.concatenate(b_cols)[None, :])    # [1, 2*D*len(members)]

    ow_t = jnp.transpose(params["out_proj_w"], (0, 2, 1))   # [E, D, D] = Wo^T per expert
    fcw_t = jnp.transpose(params["fc_w"], (0, 2, 1))        # [E, D, D] = Wfc^T per expert
    ob = params["out_proj_b"].reshape(E, 1, D)              # broadcast-ready biases
    fcb = params["fc_b"].reshape(E, 1, D)
    gw_t = params["gate_w"].T                               # [D, E]
    gb = params["gate_b"].reshape(1, E)

    # Lane-pad the classifier so the kernel's final matmul/store are lane-dense.
    C_pad = max(128, ((C + 127) // 128) * 128)
    cw_t = jnp.zeros((D, C_pad), f32).at[:, :C].set(params["cls_w"].T)
    cb = jnp.zeros((1, C_pad), f32).at[:, :C].set(params["cls_b"].reshape(1, C))

    # ---- batch grid: parallel blocks (v7x megacore) when batch is large enough ----
    if block_b is None:
        # Keep each block's output sublane dim a multiple of 8 (or the full batch).
        block_b = B // 2 if (B % 16 == 0) else B
    assert B % block_b == 0, "batch must be divisible by block_b"
    grid = (B // block_b,)

    weight_args = [wq_all, bq_all, *kv_args, ow_t, ob, fcw_t, fcb, gw_t, gb, cw_t, cb]

    # ---- VMEM budget (explicit; default scoped limit is only 16/32 MiB) ----
    weight_bytes = sum(int(w.size) * w.dtype.itemsize for w in weight_args)
    act_bytes = block_b * n_streams * S * D * 4
    out_bytes = block_b * C_pad * 4
    inter_bytes = (block_b * S * E * D * 4 * 3                 # q_all + fused K/V projs
                   + 3 * E * H * block_b * S * hd * 4 * 2      # stacked q/k/v (+bf16)
                   + E * H * block_b * S * S * 4 * 4)          # scores / softmax temps
    vmem_est = 2 * (act_bytes + out_bytes + weight_bytes) + inter_bytes
    vmem_limit = int(min(64 << 20, max(32 << 20, vmem_est)))   # 64 MiB = v7x physical cap

    def _batched_spec(a, bb):
        rest = (0,) * (a.ndim - 1)
        return pl.BlockSpec((bb,) + tuple(a.shape[1:]), lambda i: (i,) + rest,
                            memory_space=pltpu.MemorySpace.VMEM)

    def _full_spec(a):
        zeros = (0,) * a.ndim
        return pl.BlockSpec(tuple(a.shape), lambda i: zeros,
                            memory_space=pltpu.MemorySpace.VMEM)

    in_specs = [_batched_spec(x, block_b)] + [_full_spec(w) for w in weight_args]
    out_specs = pl.BlockSpec((block_b, C_pad), lambda i: (i, 0),
                             memory_space=pltpu.MemorySpace.VMEM)

    kernel = functools.partial(moe_kernel, S=S, D=D, E=E, H=H, groups=tuple(groups))

    out = pl.pallas_call(
        kernel,
        grid=grid,
        in_specs=in_specs,
        out_specs=out_specs,
        out_shape=jax.ShapeDtypeStruct((B, C_pad), f32),
        compiler_params=pltpu.CompilerParams(
            dimension_semantics=("parallel",),
            vmem_limit_bytes=vmem_limit),
    )(x, *weight_args)
    return out[:, :C]


def init_params(key, D, num_experts, num_classes):
    ks = jax.random.split(key, 10)
    s = 0.05
    return dict(
        in_proj_w=jax.random.normal(ks[0], (num_experts, 3 * D, D), jnp.float32) * s,
        in_proj_b=jax.random.normal(ks[1], (num_experts, 3 * D), jnp.float32) * s,
        out_proj_w=jax.random.normal(ks[2], (num_experts, D, D), jnp.float32) * s,
        out_proj_b=jax.random.normal(ks[3], (num_experts, D), jnp.float32) * s,
        fc_w=jax.random.normal(ks[4], (num_experts, D, D), jnp.float32) * s,
        fc_b=jax.random.normal(ks[5], (num_experts, D), jnp.float32) * s,
        gate_w=jax.random.normal(ks[6], (num_experts, D), jnp.float32) * s,
        gate_b=jax.random.normal(ks[7], (1, num_experts), jnp.float32) * s,
        cls_w=jax.random.normal(ks[8], (num_classes, D), jnp.float32) * s,
        cls_b=jax.random.normal(ks[9], (1, num_classes), jnp.float32) * s,
    )


def reference(x, params, num_heads):
    """Pure-JAX reference mirroring the PyTorch forward."""
    B, _, S, D = x.shape
    E = params["in_proj_w"].shape[0]
    hd = D // num_heads
    wt, mut, diff = x[:, 0], x[:, 1], x[:, 2]
    kv_list = [mut, diff]
    expert_outs = []
    for e in range(E):
        kv = kv_list[e % len(kv_list)]
        wq, wk, wv = (params["in_proj_w"][e, :D],
                      params["in_proj_w"][e, D:2 * D],
                      params["in_proj_w"][e, 2 * D:])
        bq, bk, bv = (params["in_proj_b"][e, :D],
                      params["in_proj_b"][e, D:2 * D],
                      params["in_proj_b"][e, 2 * D:])
        q = jnp.einsum("bsd,ed->bse", wt, wq) + bq
        k = jnp.einsum("bsd,ed->bse", kv, wk) + bk
        v = jnp.einsum("bsd,ed->bse", kv, wv) + bv
        q = q.reshape(B, S, num_heads, hd).transpose(0, 2, 1, 3)
        k = k.reshape(B, S, num_heads, hd).transpose(0, 2, 1, 3)
        v = v.reshape(B, S, num_heads, hd).transpose(0, 2, 1, 3)
        sc = jnp.einsum("bhqd,bhkd->bhqk", q, k) / (float(hd) ** 0.5)
        p = jax.nn.softmax(sc, axis=-1)
        o = jnp.einsum("bhqk,bhkd->bhqd", p, v).transpose(0, 2, 1, 3).reshape(B, S, D)
        o = o @ params["out_proj_w"][e].T + params["out_proj_b"][e]
        pooled = o.mean(axis=1)
        expert_outs.append(pooled @ params["fc_w"][e].T + params["fc_b"][e])
    expert_outs = jnp.stack(expert_outs, axis=1)
    gate = jax.nn.softmax(wt.mean(axis=1) @ params["gate_w"].T + params["gate_b"], axis=-1)
    fused = jnp.sum(gate[:, :, None] * expert_outs, axis=1)
    return fused @ params["cls_w"].T + params["cls_b"]


if __name__ == "__main__":
    B, S, D = 2, 8, 32
    NUM_HEADS, NUM_CLASSES, NUM_EXPERTS = 2, 3, 3

    key = jax.random.PRNGKey(0)
    kx, kp = jax.random.split(key)
    x = jax.random.normal(kx, (B, 3, S, D), jnp.float32)
    params = init_params(kp, D, NUM_EXPERTS, NUM_CLASSES)

    out = mixture_of_experts(x, params, num_heads=NUM_HEADS)
    out = jax.block_until_ready(out)

    ref = reference(x, params, NUM_HEADS)
    assert out.shape == (B, NUM_CLASSES), out.shape
    assert jnp.allclose(out, ref, atol=2e-3, rtol=2e-3), (out, ref)
    print("KERNEL_OK")
</pallas_src>

<mosaic_0001>
module attributes {stable_mosaic.version = 11 : i64} {
  func.func @moe_kernel(%arg0: i32, %arg1: memref<2x3x8x32xf32, #tpu.memory_space<vmem>>, %arg2: memref<32x96xf32, #tpu.memory_space<vmem>>, %arg3: memref<1x96xf32, #tpu.memory_space<vmem>>, %arg4: memref<32x128xf32, #tpu.memory_space<vmem>>, %arg5: memref<1x128xf32, #tpu.memory_space<vmem>>, %arg6: memref<32x64xf32, #tpu.memory_space<vmem>>, %arg7: memref<1x64xf32, #tpu.memory_space<vmem>>, %arg8: memref<3x32x32xf32, #tpu.memory_space<vmem>>, %arg9: memref<3x1x32xf32, #tpu.memory_space<vmem>>, %arg10: memref<3x32x32xf32, #tpu.memory_space<vmem>>, %arg11: memref<3x1x32xf32, #tpu.memory_space<vmem>>, %arg12: memref<32x3xf32, #tpu.memory_space<vmem>>, %arg13: memref<1x3xf32, #tpu.memory_space<vmem>>, %arg14: memref<32x128xf32, #tpu.memory_space<vmem>>, %arg15: memref<1x128xf32, #tpu.memory_space<vmem>>, %arg16: memref<2x128xf32, #tpu.memory_space<vmem>>) attributes {dimension_semantics = [#tpu.dimension_semantics<parallel>], iteration_bounds = array<i64: 1>, scalar_prefetch = 0 : i64, scratch_operands = 0 : i64, tpu.core_type = #tpu.core_type<tc>, window_params = [{transform_indices = @transform_0, window_bounds = array<i64: 2, 3, 8, 32>}, {pipeline_mode = #tpu.pipeline_mode<synchronous>, transform_indices = @transform_1, window_bounds = array<i64: 32, 96>}, {pipeline_mode = #tpu.pipeline_mode<synchronous>, transform_indices = @transform_2, window_bounds = array<i64: 1, 96>}, {pipeline_mode = #tpu.pipeline_mode<synchronous>, transform_indices = @transform_3, window_bounds = array<i64: 32, 128>}, {pipeline_mode = #tpu.pipeline_mode<synchronous>, transform_indices = @transform_4, window_bounds = array<i64: 1, 128>}, {pipeline_mode = #tpu.pipeline_mode<synchronous>, transform_indices = @transform_5, window_bounds = array<i64: 32, 64>}, {pipeline_mode = #tpu.pipeline_mode<synchronous>, transform_indices = @transform_6, window_bounds = array<i64: 1, 64>}, {pipeline_mode = #tpu.pipeline_mode<synchronous>, transform_indices = @transform_7, window_bounds = array<i64: 3, 32, 32>}, {pipeline_mode = #tpu.pipeline_mode<synchronous>, transform_indices = @transform_8, window_bounds = array<i64: 3, 1, 32>}, {pipeline_mode = #tpu.pipeline_mode<synchronous>, transform_indices = @transform_9, window_bounds = array<i64: 3, 32, 32>}, {pipeline_mode = #tpu.pipeline_mode<synchronous>, transform_indices = @transform_10, window_bounds = array<i64: 3, 1, 32>}, {pipeline_mode = #tpu.pipeline_mode<synchronous>, transform_indices = @transform_11, window_bounds = array<i64: 32, 3>}, {pipeline_mode = #tpu.pipeline_mode<synchronous>, transform_indices = @transform_12, window_bounds = array<i64: 1, 3>}, {pipeline_mode = #tpu.pipeline_mode<synchronous>, transform_indices = @transform_13, window_bounds = array<i64: 32, 128>}, {pipeline_mode = #tpu.pipeline_mode<synchronous>, transform_indices = @transform_14, window_bounds = array<i64: 1, 128>}, {transform_indices = @transform_15, window_bounds = array<i64: 2, 128>}]} {
    %c0 = arith.constant 0 : index
    %c0_0 = arith.constant 0 : index
    %c0_1 = arith.constant 0 : index
    %c0_2 = arith.constant 0 : index
    %0 = vector.load %arg1[%c0, %c0_0, %c0_1, %c0_2] : memref<2x3x8x32xf32, #tpu.memory_space<vmem>>, vector<2x3x8x32xf32>
    %1 = vector.extract_strided_slice %0 {offsets = [0, 0, 0, 0], sizes = [2, 1, 8, 32], strides = [1, 1, 1, 1]} : vector<2x3x8x32xf32> to vector<2x1x8x32xf32>
    %2 = vector.shape_cast %1 : vector<2x1x8x32xf32> to vector<2x8x32xf32>
    %3 = vector.shape_cast %2 : vector<2x8x32xf32> to vector<16x32xf32>
    %cst = arith.constant dense<0.000000e+00> : vector<2x32xf32>
    %4 = vector.multi_reduction <add>, %2, %cst [1] : vector<2x8x32xf32> to vector<2x32xf32>
    %cst_3 = arith.constant 8.000000e+00 : f32
    %5 = vector.broadcast %cst_3 : f32 to vector<2x32xf32>
    %6 = arith.divf %4, %5 : vector<2x32xf32>
    %c0_4 = arith.constant 0 : index
    %c0_5 = arith.constant 0 : index
    %7 = vector.load %arg12[%c0_4, %c0_5] : memref<32x3xf32, #tpu.memory_space<vmem>>, vector<32x3xf32>
    %cst_6 = arith.constant dense<0.000000e+00> : vector<2x3xf32>
    %8 = tpu.matmul %6, %7, %cst_6 {dimension_numbers = #tpu.dot_dimension_numbers<[1], [0], [0], [1], [0, 0, 1, 1], [], []>} : vector<2x32xf32>, vector<32x3xf32>, vector<2x3xf32> -> vector<2x3xf32>
    %c0_7 = arith.constant 0 : index
    %c0_8 = arith.constant 0 : index
    %9 = vector.load %arg13[%c0_7, %c0_8] : memref<1x3xf32, #tpu.memory_space<vmem>>, vector<1x3xf32>
    %10 = vector.broadcast %9 : vector<1x3xf32> to vector<2x3xf32>
    %11 = arith.addf %8, %10 : vector<2x3xf32>
    %cst_9 = arith.constant dense<0xFF800000> : vector<2xf32>
    %12 = vector.multi_reduction <maximumf>, %11, %cst_9 [1] : vector<2x3xf32> to vector<2xf32>
    %13 = vector.shape_cast %12 : vector<2xf32> to vector<2x1xf32>
    %14 = vector.broadcast %13 : vector<2x1xf32> to vector<2x3xf32>
    %15 = arith.subf %11, %14 : vector<2x3xf32>
    %16 = math.exp %15 : vector<2x3xf32>
    %cst_10 = arith.constant dense<0.000000e+00> : vector<2xf32>
    %17 = vector.multi_reduction <add>, %16, %cst_10 [1] : vector<2x3xf32> to vector<2xf32>
    %18 = vector.shape_cast %17 : vector<2xf32> to vector<2x1xf32>
    %19 = vector.broadcast %18 : vector<2x1xf32> to vector<2x3xf32>
    %20 = arith.divf %16, %19 : vector<2x3xf32>
    %c0_11 = arith.constant 0 : index
    %c0_12 = arith.constant 0 : index
    %21 = vector.load %arg2[%c0_11, %c0_12] : memref<32x96xf32, #tpu.memory_space<vmem>>, vector<32x96xf32>
    %22 = arith.truncf %3 : vector<16x32xf32> to vector<16x32xbf16>
    %23 = arith.truncf %21 : vector<32x96xf32> to vector<32x96xbf16>
    %cst_13 = arith.constant dense<0.000000e+00> : vector<16x96xf32>
    %24 = tpu.matmul %22, %23, %cst_13 {dimension_numbers = #tpu.dot_dimension_numbers<[1], [0], [0], [1], [0, 0, 1, 1], [], []>} : vector<16x32xbf16>, vector<32x96xbf16>, vector<16x96xf32> -> vector<16x96xf32>
    %c0_14 = arith.constant 0 : index
    %c0_15 = arith.constant 0 : index
    %25 = vector.load %arg3[%c0_14, %c0_15] : memref<1x96xf32, #tpu.memory_space<vmem>>, vector<1x96xf32>
    %26 = vector.broadcast %25 : vector<1x96xf32> to vector<16x96xf32>
    %27 = arith.addf %24, %26 : vector<16x96xf32>
    %28 = vector.extract_strided_slice %0 {offsets = [0, 1, 0, 0], sizes = [2, 1, 8, 32], strides = [1, 1, 1, 1]} : vector<2x3x8x32xf32> to vector<2x1x8x32xf32>
    %29 = vector.shape_cast %28 : vector<2x1x8x32xf32> to vector<2x8x32xf32>
    %30 = vector.shape_cast %29 : vector<2x8x32xf32> to vector<16x32xf32>
    %c0_16 = arith.constant 0 : index
    %c0_17 = arith.constant 0 : index
    %31 = vector.load %arg4[%c0_16, %c0_17] : memref<32x128xf32, #tpu.memory_space<vmem>>, vector<32x128xf32>
    %32 = arith.truncf %30 : vector<16x32xf32> to vector<16x32xbf16>
    %33 = arith.truncf %31 : vector<32x128xf32> to vector<32x128xbf16>
    %cst_18 = arith.constant dense<0.000000e+00> : vector<16x128xf32>
    %34 = tpu.matmul %32, %33, %cst_18 {dimension_numbers = #tpu.dot_dimension_numbers<[1], [0], [0], [1], [0, 0, 1, 1], [], []>} : vector<16x32xbf16>, vector<32x128xbf16>, vector<16x128xf32> -> vector<16x128xf32>
    %c0_19 = arith.constant 0 : index
    %c0_20 = arith.constant 0 : index
    %35 = vector.load %arg5[%c0_19, %c0_20] : memref<1x128xf32, #tpu.memory_space<vmem>>, vector<1x128xf32>
    %36 = vector.broadcast %35 : vector<1x128xf32> to vector<16x128xf32>
    %37 = arith.addf %34, %36 : vector<16x128xf32>
    %38 = vector.extract_strided_slice %0 {offsets = [0, 2, 0, 0], sizes = [2, 1, 8, 32], strides = [1, 1, 1, 1]} : vector<2x3x8x32xf32> to vector<2x1x8x32xf32>
    %39 = vector.shape_cast %38 : vector<2x1x8x32xf32> to vector<2x8x32xf32>
    %40 = vector.shape_cast %39 : vector<2x8x32xf32> to vector<16x32xf32>
    %c0_21 = arith.constant 0 : index
    %c0_22 = arith.constant 0 : index
    %41 = vector.load %arg6[%c0_21, %c0_22] : memref<32x64xf32, #tpu.memory_space<vmem>>, vector<32x64xf32>
    %42 = arith.truncf %40 : vector<16x32xf32> to vector<16x32xbf16>
    %43 = arith.truncf %41 : vector<32x64xf32> to vector<32x64xbf16>
    %cst_23 = arith.constant dense<0.000000e+00> : vector<16x64xf32>
    %44 = tpu.matmul %42, %43, %cst_23 {dimension_numbers = #tpu.dot_dimension_numbers<[1], [0], [0], [1], [0, 0, 1, 1], [], []>} : vector<16x32xbf16>, vector<32x64xbf16>, vector<16x64xf32> -> vector<16x64xf32>
    %c0_24 = arith.constant 0 : index
    %c0_25 = arith.constant 0 : index
    %45 = vector.load %arg7[%c0_24, %c0_25] : memref<1x64xf32, #tpu.memory_space<vmem>>, vector<1x64xf32>
    %46 = vector.broadcast %45 : vector<1x64xf32> to vector<16x64xf32>
    %47 = arith.addf %44, %46 : vector<16x64xf32>
    %48 = vector.extract_strided_slice %27 {offsets = [0, 0], sizes = [16, 16], strides = [1, 1]} : vector<16x96xf32> to vector<16x16xf32>
    %49 = vector.shape_cast %48 : vector<16x16xf32> to vector<2x8x16xf32>
    %50 = vector.extract_strided_slice %37 {offsets = [0, 0], sizes = [16, 16], strides = [1, 1]} : vector<16x128xf32> to vector<16x16xf32>
    %51 = vector.shape_cast %50 : vector<16x16xf32> to vector<2x8x16xf32>
    %52 = vector.extract_strided_slice %37 {offsets = [0, 32], sizes = [16, 16], strides = [1, 1]} : vector<16x128xf32> to vector<16x16xf32>
    %53 = vector.shape_cast %52 : vector<16x16xf32> to vector<2x8x16xf32>
    %54 = vector.extract_strided_slice %27 {offsets = [0, 16], sizes = [16, 16], strides = [1, 1]} : vector<16x96xf32> to vector<16x16xf32>
    %55 = vector.shape_cast %54 : vector<16x16xf32> to vector<2x8x16xf32>
    %56 = vector.extract_strided_slice %37 {offsets = [0, 16], sizes = [16, 16], strides = [1, 1]} : vector<16x128xf32> to vector<16x16xf32>
    %57 = vector.shape_cast %56 : vector<16x16xf32> to vector<2x8x16xf32>
    %58 = vector.extract_strided_slice %37 {offsets = [0, 48], sizes = [16, 16], strides = [1, 1]} : vector<16x128xf32> to vector<16x16xf32>
    %59 = vector.shape_cast %58 : vector<16x16xf32> to vector<2x8x16xf32>
    %60 = vector.extract_strided_slice %27 {offsets = [0, 32], sizes = [16, 16], strides = [1, 1]} : vector<16x96xf32> to vector<16x16xf32>
    %61 = vector.shape_cast %60 : vector<16x16xf32> to vector<2x8x16xf32>
    %62 = vector.extract_strided_slice %47 {offsets = [0, 0], sizes = [16, 16], strides = [1, 1]} : vector<16x64xf32> to vector<16x16xf32>
    %63 = vector.shape_cast %62 : vector<16x16xf32> to vector<2x8x16xf32>
    %64 = vector.extract_strided_slice %47 {offsets = [0, 32], sizes = [16, 16], strides = [1, 1]} : vector<16x64xf32> to vector<16x16xf32>
    %65 = vector.shape_cast %64 : vector<16x16xf32> to vector<2x8x16xf32>
    %66 = vector.extract_strided_slice %27 {offsets = [0, 48], sizes = [16, 16], strides = [1, 1]} : vector<16x96xf32> to vector<16x16xf32>
    %67 = vector.shape_cast %66 : vector<16x16xf32> to vector<2x8x16xf32>
    %68 = vector.extract_strided_slice %47 {offsets = [0, 16], sizes = [16, 16], strides = [1, 1]} : vector<16x64xf32> to vector<16x16xf32>
    %69 = vector.shape_cast %68 : vector<16x16xf32> to vector<2x8x16xf32>
    %70 = vector.extract_strided_slice %47 {offsets = [0, 48], sizes = [16, 16], strides = [1, 1]} : vector<16x64xf32> to vector<16x16xf32>
    %71 = vector.shape_cast %70 : vector<16x16xf32> to vector<2x8x16xf32>
    %72 = vector.extract_strided_slice %27 {offsets = [0, 64], sizes = [16, 16], strides = [1, 1]} : vector<16x96xf32> to vector<16x16xf32>
    %73 = vector.shape_cast %72 : vector<16x16xf32> to vector<2x8x16xf32>
    %74 = vector.extract_strided_slice %37 {offsets = [0, 64], sizes = [16, 16], strides = [1, 1]} : vector<16x128xf32> to vector<16x16xf32>
    %75 = vector.shape_cast %74 : vector<16x16xf32> to vector<2x8x16xf32>
    %76 = vector.extract_strided_slice %37 {offsets = [0, 96], sizes = [16, 16], strides = [1, 1]} : vector<16x128xf32> to vector<16x16xf32>
    %77 = vector.shape_cast %76 : vector<16x16xf32> to vector<2x8x16xf32>
    %78 = vector.extract_strided_slice %27 {offsets = [0, 80], sizes = [16, 16], strides = [1, 1]} : vector<16x96xf32> to vector<16x16xf32>
    %79 = vector.shape_cast %78 : vector<16x16xf32> to vector<2x8x16xf32>
    %80 = vector.extract_strided_slice %37 {offsets = [0, 80], sizes = [16, 16], strides = [1, 1]} : vector<16x128xf32> to vector<16x16xf32>
    %81 = vector.shape_cast %80 : vector<16x16xf32> to vector<2x8x16xf32>
    %82 = vector.extract_strided_slice %37 {offsets = [0, 112], sizes = [16, 16], strides = [1, 1]} : vector<16x128xf32> to vector<16x16xf32>
    %83 = vector.shape_cast %82 : vector<16x16xf32> to vector<2x8x16xf32>
    %84 = tpu.concatenate %49, %55, %61, %67, %73, %79 in 0 : vector<2x8x16xf32>, vector<2x8x16xf32>, vector<2x8x16xf32>, vector<2x8x16xf32>, vector<2x8x16xf32>, vector<2x8x16xf32> -> vector<12x8x16xf32>
    %85 = arith.truncf %84 : vector<12x8x16xf32> to vector<12x8x16xbf16>
    %86 = tpu.concatenate %51, %57, %63, %69, %75, %81 in 0 : vector<2x8x16xf32>, vector<2x8x16xf32>, vector<2x8x16xf32>, vector<2x8x16xf32>, vector<2x8x16xf32>, vector<2x8x16xf32> -> vector<12x8x16xf32>
    %87 = arith.truncf %86 : vector<12x8x16xf32> to vector<12x8x16xbf16>
    %88 = tpu.concatenate %53, %59, %65, %71, %77, %83 in 0 : vector<2x8x16xf32>, vector<2x8x16xf32>, vector<2x8x16xf32>, vector<2x8x16xf32>, vector<2x8x16xf32>, vector<2x8x16xf32> -> vector<12x8x16xf32>
    "tpu.trace_start"() <{level = 10 : i32, message = "bqd,bkd->bqk"}> : () -> ()
    %cst_26 = arith.constant dense<0.000000e+00> : vector<12x8x8xf32>
    %89 = tpu.matmul %85, %87, %cst_26 {dimension_numbers = #tpu.dot_dimension_numbers<[2], [2], [1], [1], [0, 0, 0, 1, 1, 1], [0], [0]>} : vector<12x8x16xbf16>, vector<12x8x16xbf16>, vector<12x8x8xf32> -> vector<12x8x8xf32>
    "tpu.trace_stop"() : () -> ()
    %cst_27 = arith.constant dense<0xFF800000> : vector<12x8xf32>
    %90 = vector.multi_reduction <maximumf>, %89, %cst_27 [2] : vector<12x8x8xf32> to vector<12x8xf32>
    %91 = vector.shape_cast %90 : vector<12x8xf32> to vector<12x8x1xf32>
    %92 = vector.broadcast %91 : vector<12x8x1xf32> to vector<12x8x8xf32>
    %93 = arith.subf %89, %92 : vector<12x8x8xf32>
    %94 = math.exp %93 : vector<12x8x8xf32>
    %cst_28 = arith.constant dense<0.000000e+00> : vector<12x8xf32>
    %95 = vector.multi_reduction <add>, %94, %cst_28 [2] : vector<12x8x8xf32> to vector<12x8xf32>
    %96 = vector.shape_cast %95 : vector<12x8xf32> to vector<12x8x1xf32>
    %97 = tpu.reciprocal %96 {approx = true} : vector<12x8x1xf32> -> vector<12x8x1xf32>
    %98 = vector.broadcast %97 : vector<12x8x1xf32> to vector<12x8x8xf32>
    %99 = arith.mulf %94, %98 : vector<12x8x8xf32>
    %cst_29 = arith.constant dense<0.000000e+00> : vector<12x8xf32>
    %100 = vector.multi_reduction <add>, %99, %cst_29 [1] : vector<12x8x8xf32> to vector<12x8xf32>
    %101 = vector.shape_cast %100 : vector<12x8xf32> to vector<12x1x8xf32>
    %cst_30 = arith.constant 8.000000e+00 : f32
    %102 = vector.broadcast %cst_30 : f32 to vector<12x1x8xf32>
    %103 = arith.divf %101, %102 : vector<12x1x8xf32>
    "tpu.trace_start"() <{level = 10 : i32, message = "bqk,bkd->bqd"}> : () -> ()
    %cst_31 = arith.constant dense<0.000000e+00> : vector<12x1x16xf32>
    %104 = tpu.matmul %103, %88, %cst_31 {dimension_numbers = #tpu.dot_dimension_numbers<[2], [1], [1], [2], [0, 0, 0, 1, 1, 2], [0], [0]>} : vector<12x1x8xf32>, vector<12x8x16xf32>, vector<12x1x16xf32> -> vector<12x1x16xf32>
    "tpu.trace_stop"() : () -> ()
    %105 = vector.extract_strided_slice %104 {offsets = [0, 0, 0], sizes = [2, 1, 16], strides = [1, 1, 1]} : vector<12x1x16xf32> to vector<2x1x16xf32>
    %106 = vector.shape_cast %105 : vector<2x1x16xf32> to vector<2x16xf32>
    %107 = vector.extract_strided_slice %104 {offsets = [2, 0, 0], sizes = [2, 1, 16], strides = [1, 1, 1]} : vector<12x1x16xf32> to vector<2x1x16xf32>
    %108 = vector.shape_cast %107 : vector<2x1x16xf32> to vector<2x16xf32>
    %109 = tpu.concatenate %106, %108 in 1 : vector<2x16xf32>, vector<2x16xf32> -> vector<2x32xf32>
    %110 = vector.extract_strided_slice %104 {offsets = [4, 0, 0], sizes = [2, 1, 16], strides = [1, 1, 1]} : vector<12x1x16xf32> to vector<2x1x16xf32>
    %111 = vector.shape_cast %110 : vector<2x1x16xf32> to vector<2x16xf32>
    %112 = vector.extract_strided_slice %104 {offsets = [6, 0, 0], sizes = [2, 1, 16], strides = [1, 1, 1]} : vector<12x1x16xf32> to vector<2x1x16xf32>
    %113 = vector.shape_cast %112 : vector<2x1x16xf32> to vector<2x16xf32>
    %114 = tpu.concatenate %111, %113 in 1 : vector<2x16xf32>, vector<2x16xf32> -> vector<2x32xf32>
    %115 = vector.extract_strided_slice %104 {offsets = [8, 0, 0], sizes = [2, 1, 16], strides = [1, 1, 1]} : vector<12x1x16xf32> to vector<2x1x16xf32>
    %116 = vector.shape_cast %115 : vector<2x1x16xf32> to vector<2x16xf32>
    %117 = vector.extract_strided_slice %104 {offsets = [10, 0, 0], sizes = [2, 1, 16], strides = [1, 1, 1]} : vector<12x1x16xf32> to vector<2x1x16xf32>
    %118 = vector.shape_cast %117 : vector<2x1x16xf32> to vector<2x16xf32>
    %119 = tpu.concatenate %116, %118 in 1 : vector<2x16xf32>, vector<2x16xf32> -> vector<2x32xf32>
    %120 = vector.shape_cast %109 : vector<2x32xf32> to vector<1x2x32xf32>
    %121 = vector.shape_cast %114 : vector<2x32xf32> to vector<1x2x32xf32>
    %122 = vector.shape_cast %119 : vector<2x32xf32> to vector<1x2x32xf32>
    %123 = tpu.concatenate %120, %121, %122 in 0 : vector<1x2x32xf32>, vector<1x2x32xf32>, vector<1x2x32xf32> -> vector<3x2x32xf32>
    %124 = arith.truncf %123 : vector<3x2x32xf32> to vector<3x2x32xbf16>
    %c0_32 = arith.constant 0 : index
    %c0_33 = arith.constant 0 : index
    %c0_34 = arith.constant 0 : index
    %125 = vector.load %arg8[%c0_32, %c0_33, %c0_34] : memref<3x32x32xf32, #tpu.memory_space<vmem>>, vector<3x32x32xf32>
    %126 = arith.truncf %125 : vector<3x32x32xf32> to vector<3x32x32xbf16>
    "tpu.trace_start"() <{level = 10 : i32, message = "ebd,edf->ebf"}> : () -> ()
    %cst_35 = arith.constant dense<0.000000e+00> : vector<3x2x32xf32>
    %127 = tpu.matmul %124, %126, %cst_35 {dimension_numbers = #tpu.dot_dimension_numbers<[2], [1], [1], [2], [0, 0, 0, 1, 1, 2], [0], [0]>} : vector<3x2x32xbf16>, vector<3x32x32xbf16>, vector<3x2x32xf32> -> vector<3x2x32xf32>
    "tpu.trace_stop"() : () -> ()
    %c0_36 = arith.constant 0 : index
    %c0_37 = arith.constant 0 : index
    %c0_38 = arith.constant 0 : index
    %128 = vector.load %arg9[%c0_36, %c0_37, %c0_38] : memref<3x1x32xf32, #tpu.memory_space<vmem>>, vector<3x1x32xf32>
    %129 = vector.broadcast %128 : vector<3x1x32xf32> to vector<3x2x32xf32>
    %130 = arith.addf %127, %129 : vector<3x2x32xf32>
    %131 = arith.truncf %130 : vector<3x2x32xf32> to vector<3x2x32xbf16>
    %c0_39 = arith.constant 0 : index
    %c0_40 = arith.constant 0 : index
    %c0_41 = arith.constant 0 : index
    %132 = vector.load %arg10[%c0_39, %c0_40, %c0_41] : memref<3x32x32xf32, #tpu.memory_space<vmem>>, vector<3x32x32xf32>
    %133 = arith.truncf %132 : vector<3x32x32xf32> to vector<3x32x32xbf16>
    "tpu.trace_start"() <{level = 10 : i32, message = "ebd,edf->ebf"}> : () -> ()
    %cst_42 = arith.constant dense<0.000000e+00> : vector<3x2x32xf32>
    %134 = tpu.matmul %131, %133, %cst_42 {dimension_numbers = #tpu.dot_dimension_numbers<[2], [1], [1], [2], [0, 0, 0, 1, 1, 2], [0], [0]>} : vector<3x2x32xbf16>, vector<3x32x32xbf16>, vector<3x2x32xf32> -> vector<3x2x32xf32>
    "tpu.trace_stop"() : () -> ()
    %c0_43 = arith.constant 0 : index
    %c0_44 = arith.constant 0 : index
    %c0_45 = arith.constant 0 : index
    %135 = vector.load %arg11[%c0_43, %c0_44, %c0_45] : memref<3x1x32xf32, #tpu.memory_space<vmem>>, vector<3x1x32xf32>
    %136 = vector.broadcast %135 : vector<3x1x32xf32> to vector<3x2x32xf32>
    %137 = arith.addf %134, %136 : vector<3x2x32xf32>
    %138 = vector.extract_strided_slice %20 {offsets = [0, 0], sizes = [2, 1], strides = [1, 1]} : vector<2x3xf32> to vector<2x1xf32>
    %139 = vector.extract_strided_slice %137 {offsets = [0, 0, 0], sizes = [1, 2, 32], strides = [1, 1, 1]} : vector<3x2x32xf32> to vector<1x2x32xf32>
    %140 = vector.shape_cast %139 : vector<1x2x32xf32> to vector<2x32xf32>
    %141 = vector.broadcast %138 : vector<2x1xf32> to vector<2x32xf32>
    %142 = arith.mulf %141, %140 : vector<2x32xf32>
    %143 = vector.extract_strided_slice %20 {offsets = [0, 1], sizes = [2, 1], strides = [1, 1]} : vector<2x3xf32> to vector<2x1xf32>
    %144 = vector.extract_strided_slice %137 {offsets = [1, 0, 0], sizes = [1, 2, 32], strides = [1, 1, 1]} : vector<3x2x32xf32> to vector<1x2x32xf32>
    %145 = vector.shape_cast %144 : vector<1x2x32xf32> to vector<2x32xf32>
    %146 = vector.broadcast %143 : vector<2x1xf32> to vector<2x32xf32>
    %147 = arith.mulf %146, %145 : vector<2x32xf32>
    %148 = arith.addf %142, %147 : vector<2x32xf32>
    %149 = vector.extract_strided_slice %20 {offsets = [0, 2], sizes = [2, 1], strides = [1, 1]} : vector<2x3xf32> to vector<2x1xf32>
    %150 = vector.extract_strided_slice %137 {offsets = [2, 0, 0], sizes = [1, 2, 32], strides = [1, 1, 1]} : vector<3x2x32xf32> to vector<1x2x32xf32>
    %151 = vector.shape_cast %150 : vector<1x2x32xf32> to vector<2x32xf32>
    %152 = vector.broadcast %149 : vector<2x1xf32> to vector<2x32xf32>
    %153 = arith.mulf %152, %151 : vector<2x32xf32>
    %154 = arith.addf %148, %153 : vector<2x32xf32>
    %c0_46 = arith.constant 0 : index
    %c0_47 = arith.constant 0 : index
    %155 = vector.load %arg14[%c0_46, %c0_47] : memref<32x128xf32, #tpu.memory_space<vmem>>, vector<32x128xf32>
    %156 = arith.truncf %154 : vector<2x32xf32> to vector<2x32xbf16>
    %157 = arith.truncf %155 : vector<32x128xf32> to vector<32x128xbf16>
    %cst_48 = arith.constant dense<0.000000e+00> : vector<2x128xf32>
    %158 = tpu.matmul %156, %157, %cst_48 {dimension_numbers = #tpu.dot_dimension_numbers<[1], [0], [0], [1], [0, 0, 1, 1], [], []>} : vector<2x32xbf16>, vector<32x128xbf16>, vector<2x128xf32> -> vector<2x128xf32>
    %c0_49 = arith.constant 0 : index
    %c0_50 = arith.constant 0 : index
    %159 = vector.load %arg15[%c0_49, %c0_50] : memref<1x128xf32, #tpu.memory_space<vmem>>, vector<1x128xf32>
    %160 = vector.broadcast %159 : vector<1x128xf32> to vector<2x128xf32>
    %161 = arith.addf %158, %160 : vector<2x128xf32>
    %c0_51 = arith.constant 0 : index
    %c0_52 = arith.constant 0 : index
    %162 = vector.load %arg16[%c0_51, %c0_52] : memref<2x128xf32, #tpu.memory_space<vmem>>, vector<2x128xf32>
    tpu.vector_store %arg16[%c0_51, %c0_52], %161 {strides = array<i32>} : memref<2x128xf32, #tpu.memory_space<vmem>>, vector<2x128xf32>,
    return
  }
  func.func @transform_0(%arg0: i32) -> (i32, i32, i32, i32) {
    %c0_i32 = arith.constant 0 : i32
    %c0_i32_0 = arith.constant 0 : i32
    %c0_i32_1 = arith.constant 0 : i32
    %c0_i32_2 = arith.constant 0 : i32
    return %arg0, %c0_i32, %c0_i32_0, %c0_i32_1 : i32, i32, i32, i32
  }
  func.func @transform_1(%arg0: i32) -> (i32, i32) {
    %c0_i32 = arith.constant 0 : i32
    %c0_i32_0 = arith.constant 0 : i32
    %c0_i32_1 = arith.constant 0 : i32
    return %c0_i32, %c0_i32_0 : i32, i32
  }
  func.func @transform_2(%arg0: i32) -> (i32, i32) {
    %c0_i32 = arith.constant 0 : i32
    %c0_i32_0 = arith.constant 0 : i32
    %c0_i32_1 = arith.constant 0 : i32
    return %c0_i32, %c0_i32_0 : i32, i32
  }
  func.func @transform_3(%arg0: i32) -> (i32, i32) {
    %c0_i32 = arith.constant 0 : i32
    %c0_i32_0 = arith.constant 0 : i32
    %c0_i32_1 = arith.constant 0 : i32
    return %c0_i32, %c0_i32_0 : i32, i32
  }
  func.func @transform_4(%arg0: i32) -> (i32, i32) {
    %c0_i32 = arith.constant 0 : i32
    %c0_i32_0 = arith.constant 0 : i32
    %c0_i32_1 = arith.constant 0 : i32
    return %c0_i32, %c0_i32_0 : i32, i32
  }
  func.func @transform_5(%arg0: i32) -> (i32, i32) {
    %c0_i32 = arith.constant 0 : i32
    %c0_i32_0 = arith.constant 0 : i32
    %c0_i32_1 = arith.constant 0 : i32
    return %c0_i32, %c0_i32_0 : i32, i32
  }
  func.func @transform_6(%arg0: i32) -> (i32, i32) {
    %c0_i32 = arith.constant 0 : i32
    %c0_i32_0 = arith.constant 0 : i32
    %c0_i32_1 = arith.constant 0 : i32
    return %c0_i32, %c0_i32_0 : i32, i32
  }
  func.func @transform_7(%arg0: i32) -> (i32, i32, i32) {
    %c0_i32 = arith.constant 0 : i32
    %c0_i32_0 = arith.constant 0 : i32
    %c0_i32_1 = arith.constant 0 : i32
    %c0_i32_2 = arith.constant 0 : i32
    return %c0_i32, %c0_i32_0, %c0_i32_1 : i32, i32, i32
  }
  func.func @transform_8(%arg0: i32) -> (i32, i32, i32) {
    %c0_i32 = arith.constant 0 : i32
    %c0_i32_0 = arith.constant 0 : i32
    %c0_i32_1 = arith.constant 0 : i32
    %c0_i32_2 = arith.constant 0 : i32
    return %c0_i32, %c0_i32_0, %c0_i32_1 : i32, i32, i32
  }
  func.func @transform_9(%arg0: i32) -> (i32, i32, i32) {
    %c0_i32 = arith.constant 0 : i32
    %c0_i32_0 = arith.constant 0 : i32
    %c0_i32_1 = arith.constant 0 : i32
    %c0_i32_2 = arith.constant 0 : i32
    return %c0_i32, %c0_i32_0, %c0_i32_1 : i32, i32, i32
  }
  func.func @transform_10(%arg0: i32) -> (i32, i32, i32) {
    %c0_i32 = arith.constant 0 : i32
    %c0_i32_0 = arith.constant 0 : i32
    %c0_i32_1 = arith.constant 0 : i32
    %c0_i32_2 = arith.constant 0 : i32
    return %c0_i32, %c0_i32_0, %c0_i32_1 : i32, i32, i32
  }
  func.func @transform_11(%arg0: i32) -> (i32, i32) {
    %c0_i32 = arith.constant 0 : i32
    %c0_i32_0 = arith.constant 0 : i32
    %c0_i32_1 = arith.constant 0 : i32
    return %c0_i32, %c0_i32_0 : i32, i32
  }
  func.func @transform_12(%arg0: i32) -> (i32, i32) {
    %c0_i32 = arith.constant 0 : i32
    %c0_i32_0 = arith.constant 0 : i32
    %c0_i32_1 = arith.constant 0 : i32
    return %c0_i32, %c0_i32_0 : i32, i32
  }
  func.func @transform_13(%arg0: i32) -> (i32, i32) {
    %c0_i32 = arith.constant 0 : i32
    %c0_i32_0 = arith.constant 0 : i32
    %c0_i32_1 = arith.constant 0 : i32
    return %c0_i32, %c0_i32_0 : i32, i32
  }
  func.func @transform_14(%arg0: i32) -> (i32, i32) {
    %c0_i32 = arith.constant 0 : i32
    %c0_i32_0 = arith.constant 0 : i32
    %c0_i32_1 = arith.constant 0 : i32
    return %c0_i32, %c0_i32_0 : i32, i32
  }
  func.func @transform_15(%arg0: i32) -> (i32, i32) {
    %c0_i32 = arith.constant 0 : i32
    %c0_i32_0 = arith.constant 0 : i32
    return %arg0, %c0_i32 : i32, i32
  }
}

</mosaic_0001>

<llo_original>
// kernel: tpu_custom_call.1
$region0: #{tpu_custom_call.1}
  #allocation0 [shape = 'u32[]', space=smem, size = 0x4, offset = 0x4, fixed_abs, tag = 'smem constant byte address 0x4 - core index']
  #allocation1 [shape = 'u32[72,128]{1,0:T(1,128)}', space=vmem, size = 0x9000, scoped, tag = 'internal scratch']
  %s0 = inlined_call_operand.hbm [shape: f32[2,3,8,32], index: 0, kind: input, shape index: {}]
  %s1 = inlined_call_operand.vmem [shape: f32[32,96], index: 1, kind: input, shape index: {}]
  %s2 = inlined_call_operand.hbm [shape: f32[1,96], index: 2, kind: input, shape index: {}]
  %s3 = inlined_call_operand.hbm [shape: f32[32,128], index: 3, kind: input, shape index: {}]
  %s4 = inlined_call_operand.vmem [shape: f32[1,128], index: 4, kind: input, shape index: {}]
  %s5 = inlined_call_operand.hbm [shape: f32[32,64], index: 5, kind: input, shape index: {}]
  %s6 = inlined_call_operand.hbm [shape: f32[1,64], index: 6, kind: input, shape index: {}]
  %s7 = inlined_call_operand.hbm [shape: f32[3,32,32], index: 7, kind: input, shape index: {}]
  %s8 = inlined_call_operand.vmem [shape: f32[3,1,32], index: 8, kind: input, shape index: {}]
  %s9 = inlined_call_operand.hbm [shape: f32[3,32,32], index: 9, kind: input, shape index: {}]
  %s10 = inlined_call_operand.vmem [shape: f32[3,1,32], index: 10, kind: input, shape index: {}]
  %s11 = inlined_call_operand.vmem [shape: f32[32,3], index: 11, kind: input, shape index: {}]
  %s12 = inlined_call_operand.vmem [shape: f32[1,3], index: 12, kind: input, shape index: {}]
  %s13 = inlined_call_operand.hbm [shape: f32[32,128], index: 13, kind: input, shape index: {}]
  %s14 = inlined_call_operand.vmem [shape: f32[1,128], index: 14, kind: input, shape index: {}]
  %s15 = inlined_call_operand.hbm [shape: f32[2,128], index: 15, kind: output, shape index: {}]
  %s16 = sld [smem:[#allocation0]]
  $region102: #{tpu_custom_call.1} parent=0
    _
  %s18 = ssub.s32 1, %s16
  %s19 = scalar_select 0, %s18, %s16
  $region1: #{tpu_custom_call.1} parent=0
    #allocation2 [shape = 'u8[24576]{0}', space=vmem, size = 0x6000, scoped, tag = 'input window, operand 0, single buffered']
    #allocation3 [shape = 's32[1]{0}', space=sflag, size = 0x4, scoped, tag = 'scoped memory for tpu_custom_call.1']
    #allocation4 [shape = 's32[1]{0}', space=sflag, size = 0x4, scoped, tag = 'scoped memory for tpu_custom_call.1']
    #allocation5 [shape = 'u8[512]{0}', space=vmem, size = 0x400, scoped, tag = 'input window, operand 2, single buffered']
    #allocation6 [shape = 's32[1]{0}', space=sflag, size = 0x4, scoped, tag = 'scoped memory for tpu_custom_call.1']
    #allocation7 [shape = 'u8[16384]{0}', space=vmem, size = 0x4000, scoped, tag = 'input window, operand 3, single buffered']
    #allocation8 [shape = 'u8[16384]{0}', space=vmem, size = 0x4000, scoped, tag = 'input window, operand 5, single buffered']
    #allocation9 [shape = 's32[1]{0}', space=sflag, size = 0x4, scoped, tag = 'scoped memory for tpu_custom_call.1']
    #allocation10 [shape = 'u8[512]{0}', space=vmem, size = 0x400, scoped, tag = 'input window, operand 6, single buffered']
    #allocation11 [shape = 'u8[49152]{0}', space=vmem, size = 0xc000, scoped, tag = 'input window, operand 7, single buffered']
    #allocation12 [shape = 's32[1]{0}', space=sflag, size = 0x4, scoped, tag = 'scoped memory for tpu_custom_call.1']
    #allocation13 [shape = 'u8[49152]{0}', space=vmem, size = 0xc000, scoped, tag = 'input window, operand 9, single buffered']
    #allocation14 [shape = 'u8[16384]{0}', space=vmem, size = 0x4000, scoped, tag = 'input window, operand 13, single buffered']
    #allocation15 [shape = 's32[1]{0}', space=sflag, size = 0x4, scoped, tag = 'scoped memory for tpu_custom_call.1']
    #allocation16 [shape = 'u8[1024]{0}', space=vmem, size = 0x400, scoped, tag = 'output window, operand 0, single buffered']
    %20 = vsyncpa [#allocation3], 0
    %21 = vsyncpa [#allocation6], 0
    %22 = vsyncpa [#allocation9], 0
    %23 = vsyncpa [#allocation12], 0
    %24 = vsyncpa [#allocation15], 0
    %25 = vsyncpa [#allocation4], 0
    // Predicated region
    $region2: #{tpu_custom_call.1} parent=1 // pred_check
      _
    $region3: #{tpu_custom_call.1} parent=1 // pred_check_branch
      %27 = sbr.rel (0) target = $region5
    $region4: #{tpu_custom_call.1} parent=1 // pred_region
      %29 = vsyncadd [#allocation3], 0
      %s30 = sshll.u32 %s0, 4
      %s31 = int_to_ptr.hbm [resolvable:$true] %s30
      %s32 = sshll.u32 [#allocation2], 4
      %s33 = int_to_ptr.vmem [resolvable:$true] %s32
      %38 = dma.hbm_to_vmem [thread:$0]  %s31, 768, %s33, [#allocation3], 128, 128, 8
    $region5: #{tpu_custom_call.1} parent=1 // pred_fallthru
      _
    // Predicated region
    $region6: #{tpu_custom_call.1} parent=1 // pred_check
      _
    $region7: #{tpu_custom_call.1} parent=1 // pred_check_branch
      %40 = sbr.rel (0) target = $region9
    $region8: #{tpu_custom_call.1} parent=1 // pred_region
      _
    $region9: #{tpu_custom_call.1} parent=1 // pred_fallthru
      _
    // Predicated region
    $region10: #{tpu_custom_call.1} parent=1 // pred_check
      _
    $region11: #{tpu_custom_call.1} parent=1 // pred_check_branch
      %42 = sbr.rel (0) target = $region13
    $region12: #{tpu_custom_call.1} parent=1 // pred_region
      %44 = vsyncadd [#allocation6], 0
      %s46 = sshll.u32 %s2, 4
      %s47 = int_to_ptr.hbm [resolvable:$true] %s46
      %s48 = sshll.u32 [#allocation5], 4
      %s49 = int_to_ptr.vmem [resolvable:$true] %s48
      %51 = dma.hbm_to_vmem [thread:$0]  %s47, 16, %s49, [#allocation6]
    $region13: #{tpu_custom_call.1} parent=1 // pred_fallthru
      _
    // Predicated region
    $region14: #{tpu_custom_call.1} parent=1 // pred_check
      _
    $region15: #{tpu_custom_call.1} parent=1 // pred_check_branch
      %53 = sbr.rel (0) target = $region17
    $region16: #{tpu_custom_call.1} parent=1 // pred_region
      %55 = vsyncadd [#allocation6], 0
      %s56 = sshll.u32 %s3, 4
      %s57 = int_to_ptr.hbm [resolvable:$true] %s56
      %s58 = sshll.u32 [#allocation7], 4
      %s59 = int_to_ptr.vmem [resolvable:$true] %s58
      %64 = dma.hbm_to_vmem [thread:$0]  %s57, 512, %s59, [#allocation6], 128, 128, 8
    $region17: #{tpu_custom_call.1} parent=1 // pred_fallthru
      _
    // Predicated region
    $region18: #{tpu_custom_call.1} parent=1 // pred_check
      _
    $region19: #{tpu_custom_call.1} parent=1 // pred_check_branch
      %66 = sbr.rel (0) target = $region21
    $region20: #{tpu_custom_call.1} parent=1 // pred_region
      _
    $region21: #{tpu_custom_call.1} parent=1 // pred_fallthru
      _
    // Predicated region
    $region22: #{tpu_custom_call.1} parent=1 // pred_check
      _
    $region23: #{tpu_custom_call.1} parent=1 // pred_check_branch
      %68 = sbr.rel (0) target = $region25
    $region24: #{tpu_custom_call.1} parent=1 // pred_region
      %70 = vsyncadd [#allocation9], 0
      %s71 = sshll.u32 %s5, 4
      %s72 = int_to_ptr.hbm [resolvable:$true] %s71
      %s73 = sshll.u32 [#allocation8], 4
      %s74 = int_to_ptr.vmem [resolvable:$true] %s73
      %79 = dma.hbm_to_vmem [thread:$0]  %s72, 512, %s74, [#allocation9], 128, 128, 8
    $region25: #{tpu_custom_call.1} parent=1 // pred_fallthru
      _
    // Predicated region
    $region26: #{tpu_custom_call.1} parent=1 // pred_check
      _
    $region27: #{tpu_custom_call.1} parent=1 // pred_check_branch
      %81 = sbr.rel (0) target = $region29
    $region28: #{tpu_custom_call.1} parent=1 // pred_region
      %83 = vsyncadd [#allocation9], 0
      %s85 = sshll.u32 %s6, 4
      %s86 = int_to_ptr.hbm [resolvable:$true] %s85
      %s87 = sshll.u32 [#allocation10], 4
      %s88 = int_to_ptr.vmem [resolvable:$true] %s87
      %90 = dma.hbm_to_vmem [thread:$0]  %s86, 16, %s88, [#allocation9]
    $region29: #{tpu_custom_call.1} parent=1 // pred_fallthru
      _
    // Predicated region
    $region30: #{tpu_custom_call.1} parent=1 // pred_check
      _
    $region31: #{tpu_custom_call.1} parent=1 // pred_check_branch
      %92 = sbr.rel (0) target = $region33
    $region32: #{tpu_custom_call.1} parent=1 // pred_region
      %94 = vsyncadd [#allocation12], 0
      %s95 = sshll.u32 %s7, 4
      %s96 = int_to_ptr.hbm [resolvable:$true] %s95
      %s97 = sshll.u32 [#allocation11], 4
      %s98 = int_to_ptr.vmem [resolvable:$true] %s97
      %103 = dma.hbm_to_vmem [thread:$0]  %s96, 1536, %s98, [#allocation12], 128, 128, 8
    $region33: #{tpu_custom_call.1} parent=1 // pred_fallthru
      _
    // Predicated region
    $region34: #{tpu_custom_call.1} parent=1 // pred_check
      _
    $region35: #{tpu_custom_call.1} parent=1 // pred_check_branch
      %105 = sbr.rel (0) target = $region37
    $region36: #{tpu_custom_call.1} parent=1 // pred_region
      _
    $region37: #{tpu_custom_call.1} parent=1 // pred_fallthru
      _
    // Predicated region
    $region38: #{tpu_custom_call.1} parent=1 // pred_check
      _
    $region39: #{tpu_custom_call.1} parent=1 // pred_check_branch
      %107 = sbr.rel (0) target = $region41
    $region40: #{tpu_custom_call.1} parent=1 // pred_region
      %109 = vsyncadd [#allocation12], 0
      %s110 = sshll.u32 %s9, 4
      %s111 = int_to_ptr.hbm [resolvable:$true] %s110
      %s112 = sshll.u32 [#allocation13], 4
      %s113 = int_to_ptr.vmem [resolvable:$true] %s112
      %118 = dma.hbm_to_vmem [thread:$0]  %s111, 1536, %s113, [#allocation12], 128, 128, 8
    $region41: #{tpu_custom_call.1} parent=1 // pred_fallthru
      _
    // Predicated region
    $region42: #{tpu_custom_call.1} parent=1 // pred_check
      _
    $region43: #{tpu_custom_call.1} parent=1 // pred_check_branch
      %120 = sbr.rel (0) target = $region45
    $region44: #{tpu_custom_call.1} parent=1 // pred_region
      _
    $region45: #{tpu_custom_call.1} parent=1 // pred_fallthru
      _
    // Predicated region
    $region46: #{tpu_custom_call.1} parent=1 // pred_check
      _
    $region47: #{tpu_custom_call.1} parent=1 // pred_check_branch
      %122 = sbr.rel (0) target = $region49
    $region48: #{tpu_custom_call.1} parent=1 // pred_region
      _
    $region49: #{tpu_custom_call.1} parent=1 // pred_fallthru
      _
    // Predicated region
    $region50: #{tpu_custom_call.1} parent=1 // pred_check
      _
    $region51: #{tpu_custom_call.1} parent=1 // pred_check_branch
      %124 = sbr.rel (0) target = $region53
    $region52: #{tpu_custom_call.1} parent=1 // pred_region
      _
    $region53: #{tpu_custom_call.1} parent=1 // pred_fallthru
      _
    // Predicated region
    $region54: #{tpu_custom_call.1} parent=1 // pred_check
      _
    $region55: #{tpu_custom_call.1} parent=1 // pred_check_branch
      %126 = sbr.rel (0) target = $region57
    $region56: #{tpu_custom_call.1} parent=1 // pred_region
      %128 = vsyncadd [#allocation15], 0
      %s129 = sshll.u32 %s13, 4
      %s130 = int_to_ptr.hbm [resolvable:$true] %s129
      %s131 = sshll.u32 [#allocation14], 4
      %s132 = int_to_ptr.vmem [resolvable:$true] %s131
      %137 = dma.hbm_to_vmem [thread:$0]  %s130, 512, %s132, [#allocation15], 128, 128, 8
    $region57: #{tpu_custom_call.1} parent=1 // pred_fallthru
      _
    // Predicated region
    $region58: #{tpu_custom_call.1} parent=1 // pred_check
      _
    $region59: #{tpu_custom_call.1} parent=1 // pred_check_branch
      %139 = sbr.rel (0) target = $region61
    $region60: #{tpu_custom_call.1} parent=1 // pred_region
      _
    $region61: #{tpu_custom_call.1} parent=1 // pred_fallthru
      _
    // Predicated region
    $region62: #{tpu_custom_call.1} parent=1 // pred_check
      _
    $region63: #{tpu_custom_call.1} parent=1 // pred_check_branch
      %141 = sbr.rel (0) target = $region65
    $region64: #{tpu_custom_call.1} parent=1 // pred_region
      %143 = dma.done [#allocation3], 768
    $region65: #{tpu_custom_call.1} parent=1 // pred_fallthru
      _
    // Predicated region
    $region66: #{tpu_custom_call.1} parent=1 // pred_check
      _
    $region67: #{tpu_custom_call.1} parent=1 // pred_check_branch
      %145 = sbr.rel (0) target = $region69
    $region68: #{tpu_custom_call.1} parent=1 // pred_region
      %147 = dma.done [#allocation6], 16
    $region69: #{tpu_custom_call.1} parent=1 // pred_fallthru
      _
    // Predicated region
    $region70: #{tpu_custom_call.1} parent=1 // pred_check
      _
    $region71: #{tpu_custom_call.1} parent=1 // pred_check_branch
      %149 = sbr.rel (0) target = $region73
    $region72: #{tpu_custom_call.1} parent=1 // pred_region
      %151 = dma.done [#allocation6], 512
    $region73: #{tpu_custom_call.1} parent=1 // pred_fallthru
      _
    // Predicated region
    $region74: #{tpu_custom_call.1} parent=1 // pred_check
      _
    $region75: #{tpu_custom_call.1} parent=1 // pred_check_branch
      %153 = sbr.rel (0) target = $region77
    $region76: #{tpu_custom_call.1} parent=1 // pred_region
      %155 = dma.done [#allocation9], 512
    $region77: #{tpu_custom_call.1} parent=1 // pred_fallthru
      _
    // Predicated region
    $region78: #{tpu_custom_call.1} parent=1 // pred_check
      _
    $region79: #{tpu_custom_call.1} parent=1 // pred_check_branch
      %157 = sbr.rel (0) target = $region81
    $region80: #{tpu_custom_call.1} parent=1 // pred_region
      %159 = dma.done [#allocation9], 16
    $region81: #{tpu_custom_call.1} parent=1 // pred_fallthru
      _
    // Predicated region
    $region82: #{tpu_custom_call.1} parent=1 // pred_check
      _
    $region83: #{tpu_custom_call.1} parent=1 // pred_check_branch
      %161 = sbr.rel (0) target = $region85
    $region84: #{tpu_custom_call.1} parent=1 // pred_region
      %163 = dma.done [#allocation12], 1536
    $region85: #{tpu_custom_call.1} parent=1 // pred_fallthru
      _
    // Predicated region
    $region86: #{tpu_custom_call.1} parent=1 // pred_check
      _
    $region87: #{tpu_custom_call.1} parent=1 // pred_check_branch
      %165 = sbr.rel (0) target = $region89
    $region88: #{tpu_custom_call.1} parent=1 // pred_region
      %167 = dma.done [#allocation12], 1536
    $region89: #{tpu_custom_call.1} parent=1 // pred_fallthru
      _
    // Predicated region
    $region90: #{tpu_custom_call.1} parent=1 // pred_check
      _
    $region91: #{tpu_custom_call.1} parent=1 // pred_check_branch
      %169 = sbr.rel (0) target = $region93
    $region92: #{tpu_custom_call.1} parent=1 // pred_region
      %171 = dma.done [#allocation15], 512
    $region93: #{tpu_custom_call.1} parent=1 // pred_fallthru
      _
    %v173 = vld [vmem:[#allocation2] sm:$0xff]
    %v174 = vld [vmem:[#allocation2 + $0x8] sm:$0xff]
    %v175 = vld [vmem:[#allocation2 + $0x10] sm:$0xff]
    %v176 = vld [vmem:[#allocation2 + $0x18] sm:$0xff]
    %v177 = vld [vmem:[#allocation2 + $0x20] sm:$0xff]
    %v178 = vld [vmem:[#allocation2 + $0x28] sm:$0xff]
    %vm179 = vcmask 261120
    %v180 = vsel %vm179, %v173, 0.0
    %v181 = vrot.slane %v180, 4
    %v182 = vadd.f32 %v180, %v181
    %v183 = vrot.slane %v182, 2
    %v184 = vadd.f32 %v182, %v183
    %v185 = vrot.slane %v184, 1
    %v186 = vadd.f32 %v184, %v185
    %v187 = vsel %vm179, %v176, 0.0
    %v188 = vrot.slane %v187, 4
    %v189 = vadd.f32 %v187, %v188
    %v190 = vrot.slane %v189, 2
    %v191 = vadd.f32 %v189, %v190
    %v192 = vrot.slane %v191, 1
    %v193 = vadd.f32 %v191, %v192
    %v194 = vrcp.pop 8.0
    %v195 = vmul.f32 8.0, %v194
    %v196 = vsub.f32 1.0, %v195
    %v197 = vmul.f32 %v194, %v196
    %v198 = vadd.f32 %v194, %v197
    %vm199 = vweird.f32 %v194
    %v200 = vsel %vm199, %v194, %v198
    %v201 = vmul.f32 %v186, %v200
    %v202 = vmul.f32 %v193, %v200
    %v203 = vld [vmem:[%s11] sm:$0xff]
    %v204 = vld [vmem:[%s11 + $0x8] sm:$0xff]
    %v205 = vld [vmem:[%s11 + $0x10] sm:$0xff]
    %v206 = vld [vmem:[%s11 + $0x18] sm:$0xff]
    %v207 = vld [vmem:[%s12] sm:$0x1]
    %v209 = vperm.slane %v207, 0
    %vm213 = vcmask 1041409
    %v214 = vsel %vm213, %v202, %v201
    %v215 = vsel %vm179, %v214, 0
    %217 = vmatpush.msra.mxu0 0.0
    %218 = vmatpush.msra.mxu0 0.0
    %219 = vmatpush.msra.mxu0 0.0
    %220 = vmatpush.msra.mxu0 0.0
    %221 = vmatpush.msra.mxu0 0.0
    %222 = vmatpush.msra.mxu0 0.0
    %223 = vmatpush.msra.mxu0 0.0
    %224 = vmatpush.msra.mxu0 0.0
    %225 = vmatpush.msra.mxu0 0.0
    %226 = vmatpush.msra.mxu0 0.0
    %227 = vmatpush.msra.mxu0 0.0
    %228 = vmatpush.msra.mxu0 0.0
    %229 = vmatpush.msra.mxu0 %v206
    %230 = vmatpush.msra.mxu0 %v205
    %231 = vmatpush.msra.mxu0 %v204
    %232 = vmatpush.msra.mxu0 %v203
    %233 = vmatmul.f32.gmra.mxu0 %v215
    %v234 = vpop.f32.mrf.mxu0
    %v235 = vadd.f32 %v209, %v234
    %236 = vdwg.mxu0
    %vm237 = vcmask 17408
    %v238 = vsel %vm237, %v235, -inf
    %239 = vmax.xlane.f32.xlu0 %v238
    %v240 = vpop.xlane.xlu0 %239
    %v241 = vsub.f32 %v235, %v240
    %v242 = vmul.f32 %v241, 1.442695
    %v243 = vpow.pop %v242
    %v244 = vsel %vm237, %v243, 0.0
    %245 = vadd.xlane.f32.xlu0 %v244
    %v246 = vpop.xlane.xlu0 %245
    %v247 = vrcp.pop %v246
    %v248 = vmul.f32 %v246, %v247
    %v249 = vsub.f32 1.0, %v248
    %v250 = vmul.f32 %v247, %v249
    %v251 = vadd.f32 %v247, %v250
    %vm252 = vweird.f32 %v246
    %vm253 = vweird.f32 %v247
    %vm254 = vmor %vm252, %vm253
    %v255 = vsel %vm254, %v247, %v251
    %v256 = vand.u32 2147483647, %v246
    %vm257 = vcmp.eq.f32.partialorder %v256, 8.507059e+37
    %v258 = vand.u32 %v246, 2147483648
    %v259 = vor.u32 1.1754944e-38, %v258
    %v260 = vsel %vm257, %v259, %v255
    %v261 = vmul.f32 %v243, %v260
    %v262 = vld [vmem:[%s1] sm:$0xff]
    %v263 = vld [vmem:[%s1 + $0x8] sm:$0xff]
    %v264 = vld [vmem:[%s1 + $0x10] sm:$0xff]
    %v265 = vld [vmem:[%s1 + $0x18] sm:$0xff]
    %v266 = vpack.c.bf16 %v176, %v173
    %v267 = vpack.c.bf16 %v263, %v262
    %v268 = vpack.c.bf16 %v265, %v264
    %v269 = vld [vmem:[#allocation5] sm:$0x1]
    %v271 = vperm.slane %v269, 0
    %v274 = vsel %vm179, %v266, 0
    %276 = vmatpush.bf16.msra.mxu0 0
    %277 = vmatpush.bf16.msra.mxu0 0
    %278 = vmatpush.bf16.msra.mxu0 0
    %279 = vmatpush.bf16.msra.mxu0 0
    %280 = vmatpush.bf16.msra.mxu0 0
    %281 = vmatpush.bf16.msra.mxu0 0
    %282 = vmatpush.bf16.msra.mxu0 %v268
    %283 = vmatpush.bf16.msra.mxu0 %v267
    %284 = vmatmul.bf16.gmra.mxu0 %v274
    %v285 = vpop.f32.mrf.mxu0
    %v286 = vadd.f32 %v271, %v285
    %v287 = vpop.f32.mrf.mxu0
    %v288 = vadd.f32 %v271, %v287
    %289 = vdwg.mxu0
    %v290 = vld [vmem:[#allocation7] sm:$0xff]
    %v291 = vld [vmem:[#allocation7 + $0x8] sm:$0xff]
    %v292 = vld [vmem:[#allocation7 + $0x10] sm:$0xff]
    %v293 = vld [vmem:[#allocation7 + $0x18] sm:$0xff]
    %v294 = vpack.c.bf16 %v177, %v174
    %v295 = vpack.c.bf16 %v291, %v290
    %v296 = vpack.c.bf16 %v293, %v292
    %v297 = vld [vmem:[%s4] sm:$0x1]
    %v299 = vperm.slane %v297, 0
    %v302 = vsel %vm179, %v294, 0
    %304 = vmatpush.bf16.msra.mxu0 0
    %305 = vmatpush.bf16.msra.mxu0 0
    %306 = vmatpush.bf16.msra.mxu0 0
    %307 = vmatpush.bf16.msra.mxu0 0
    %308 = vmatpush.bf16.msra.mxu0 0
    %309 = vmatpush.bf16.msra.mxu0 0
    %310 = vmatpush.bf16.msra.mxu0 %v296
    %311 = vmatpush.bf16.msra.mxu0 %v295
    %312 = vmatmul.bf16.gmra.mxu0 %v302
    %v313 = vpop.f32.mrf.mxu0
    %v314 = vadd.f32 %v299, %v313
    %v315 = vpop.f32.mrf.mxu0
    %v316 = vadd.f32 %v299, %v315
    %317 = vdwg.mxu0
    %v318 = vld [vmem:[#allocation8] sm:$0xff]
    %v319 = vld [vmem:[#allocation8 + $0x8] sm:$0xff]
    %v320 = vld [vmem:[#allocation8 + $0x10] sm:$0xff]
    %v321 = vld [vmem:[#allocation8 + $0x18] sm:$0xff]
    %v322 = vpack.c.bf16 %v178, %v175
    %v323 = vpack.c.bf16 %v319, %v318
    %v324 = vpack.c.bf16 %v321, %v320
    %v325 = vld [vmem:[#allocation10] sm:$0x1]
    %v327 = vperm.slane %v325, 0
    %v330 = vsel %vm179, %v322, 0
    %332 = vmatpush.bf16.msra.mxu0 0
    %333 = vmatpush.bf16.msra.mxu0 0
    %334 = vmatpush.bf16.msra.mxu0 0
    %335 = vmatpush.bf16.msra.mxu0 0
    %336 = vmatpush.bf16.msra.mxu0 0
    %337 = vmatpush.bf16.msra.mxu0 0
    %338 = vmatpush.bf16.msra.mxu0 %v324
    %339 = vmatpush.bf16.msra.mxu0 %v323
    %340 = vmatmul.bf16.gmra.mxu0 %v330
    %v341 = vpop.f32.mrf.mxu0
    %v342 = vadd.f32 %v327, %v341
    %v343 = vpop.f32.mrf.mxu0
    %v344 = vadd.f32 %v327, %v343
    %345 = vdwg.mxu0
    %348 = vrot.lane.b32.xlu0 %v286, 112
    %v349 = vpop.permute.xlu0 %348
    %350 = vrot.lane.b32.xlu0 %v288, 112
    %v351 = vpop.permute.xlu0 %350
    %354 = vrot.lane.b32.xlu0 %v286, 96
    %v355 = vpop.permute.xlu0 %354
    %356 = vrot.lane.b32.xlu0 %v288, 96
    %v357 = vpop.permute.xlu0 %356
    %360 = vrot.lane.b32.xlu0 %v286, 80
    %v361 = vpop.permute.xlu0 %360
    %362 = vrot.lane.b32.xlu0 %v288, 80
    %v363 = vpop.permute.xlu0 %362
    %366 = vrot.lane.b32.xlu0 %v286, 64
    %v367 = vpop.permute.xlu0 %366
    %368 = vrot.lane.b32.xlu0 %v288, 64
    %v369 = vpop.permute.xlu0 %368
    %372 = vrot.lane.b32.xlu0 %v286, 48
    %v373 = vpop.permute.xlu0 %372
    %374 = vrot.lane.b32.xlu0 %v288, 48
    %v375 = vpop.permute.xlu0 %374
    %v378 = vpack.c.bf16 %v286, %v286
    %v379 = vpack.c.bf16 %v288, %v288
    %v380 = vpack.c.bf16 %v349, %v349
    %v381 = vpack.c.bf16 %v351, %v351
    %v382 = vpack.c.bf16 %v355, %v355
    %v383 = vpack.c.bf16 %v357, %v357
    %v384 = vpack.c.bf16 %v361, %v361
    %v385 = vpack.c.bf16 %v363, %v363
    %v386 = vpack.c.bf16 %v367, %v367
    %v387 = vpack.c.bf16 %v369, %v369
    %v388 = vpack.c.bf16 %v373, %v373
    %v389 = vpack.c.bf16 %v375, %v375
    %392 = vrot.lane.b32.xlu0 %v314, 112
    %v393 = vpop.permute.xlu0 %392
    %394 = vrot.lane.b32.xlu0 %v316, 112
    %v395 = vpop.permute.xlu0 %394
    %400 = vrot.lane.b32.xlu0 %v342, 112
    %v401 = vpop.permute.xlu0 %400
    %402 = vrot.lane.b32.xlu0 %v344, 112
    %v403 = vpop.permute.xlu0 %402
    %406 = vrot.lane.b32.xlu0 %v314, 64
    %v407 = vpop.permute.xlu0 %406
    %408 = vrot.lane.b32.xlu0 %v316, 64
    %v409 = vpop.permute.xlu0 %408
    %412 = vrot.lane.b32.xlu0 %v314, 48
    %v413 = vpop.permute.xlu0 %412
    %414 = vrot.lane.b32.xlu0 %v316, 48
    %v415 = vpop.permute.xlu0 %414
    %v418 = vpack.c.bf16 %v314, %v314
    %v419 = vpack.c.bf16 %v316, %v316
    %v420 = vpack.c.bf16 %v393, %v393
    %v421 = vpack.c.bf16 %v395, %v395
    %v422 = vpack.c.bf16 %v342, %v342
    %v423 = vpack.c.bf16 %v344, %v344
    %v424 = vpack.c.bf16 %v401, %v401
    %v425 = vpack.c.bf16 %v403, %v403
    %v426 = vpack.c.bf16 %v407, %v407
    %v427 = vpack.c.bf16 %v409, %v409
    %v428 = vpack.c.bf16 %v413, %v413
    %v429 = vpack.c.bf16 %v415, %v415
    %vm430 = vcmask 130048
    %v432 = vsel %vm430, %v378, 0
    %v435 = vsel %vm430, %v418, 0
    %437 = vmatpush.bf16.xpose.msra.mxu0 0
    %438 = vmatpush.bf16.xpose.msra.mxu0 0
    %439 = vmatpush.bf16.xpose.msra.mxu0 0
    %440 = vmatpush.bf16.xpose.msra.mxu0 0
    %441 = vmatpush.bf16.xpose.msra.mxu0 0
    %442 = vmatpush.bf16.xpose.msra.mxu0 0
    %443 = vmatpush.bf16.xpose.msra.mxu0 0
    %444 = vmatpush.bf16.xpose.msra.mxu0 %v435
    %445 = vmatmul.bf16.gmra.mxu0 %v432
    %v446 = vpop.f32.mrf.mxu0
    %v447 = vadd.f32 0.0, %v446
    %v448 = vpop.f32.mrf.mxu0
    %449 = vdwg.mxu0
    %v451 = vsel %vm430, %v379, 0
    %v454 = vsel %vm430, %v419, 0
    %456 = vmatpush.bf16.xpose.msra.mxu0 0
    %457 = vmatpush.bf16.xpose.msra.mxu0 0
    %458 = vmatpush.bf16.xpose.msra.mxu0 0
    %459 = vmatpush.bf16.xpose.msra.mxu0 0
    %460 = vmatpush.bf16.xpose.msra.mxu0 0
    %461 = vmatpush.bf16.xpose.msra.mxu0 0
    %462 = vmatpush.bf16.xpose.msra.mxu0 0
    %463 = vmatpush.bf16.xpose.msra.mxu0 %v454
    %464 = vmatmul.bf16.gmra.mxu0 %v451
    %v465 = vpop.f32.mrf.mxu0
    %v466 = vadd.f32 0.0, %v465
    %v467 = vpop.f32.mrf.mxu0
    %468 = vdwg.mxu0
    %v470 = vsel %vm430, %v380, 0
    %v473 = vsel %vm430, %v420, 0
    %475 = vmatpush.bf16.xpose.msra.mxu0 0
    %476 = vmatpush.bf16.xpose.msra.mxu0 0
    %477 = vmatpush.bf16.xpose.msra.mxu0 0
    %478 = vmatpush.bf16.xpose.msra.mxu0 0
    %479 = vmatpush.bf16.xpose.msra.mxu0 0
    %480 = vmatpush.bf16.xpose.msra.mxu0 0
    %481 = vmatpush.bf16.xpose.msra.mxu0 0
    %482 = vmatpush.bf16.xpose.msra.mxu0 %v473
    %483 = vmatmul.bf16.gmra.mxu0 %v470
    %v484 = vpop.f32.mrf.mxu0
    %v485 = vadd.f32 0.0, %v484
    %v486 = vpop.f32.mrf.mxu0
    %487 = vdwg.mxu0
    %v489 = vsel %vm430, %v381, 0
    %v492 = vsel %vm430, %v421, 0
    %494 = vmatpush.bf16.xpose.msra.mxu0 0
    %495 = vmatpush.bf16.xpose.msra.mxu0 0
    %496 = vmatpush.bf16.xpose.msra.mxu0 0
    %497 = vmatpush.bf16.xpose.msra.mxu0 0
    %498 = vmatpush.bf16.xpose.msra.mxu0 0
    %499 = vmatpush.bf16.xpose.msra.mxu0 0
    %500 = vmatpush.bf16.xpose.msra.mxu0 0
    %501 = vmatpush.bf16.xpose.msra.mxu0 %v492
    %502 = vmatmul.bf16.gmra.mxu0 %v489
    %v503 = vpop.f32.mrf.mxu0
    %v504 = vadd.f32 0.0, %v503
    %v505 = vpop.f32.mrf.mxu0
    %506 = vdwg.mxu0
    %v508 = vsel %vm430, %v382, 0
    %v511 = vsel %vm430, %v422, 0
    %513 = vmatpush.bf16.xpose.msra.mxu0 0
    %514 = vmatpush.bf16.xpose.msra.mxu0 0
    %515 = vmatpush.bf16.xpose.msra.mxu0 0
    %516 = vmatpush.bf16.xpose.msra.mxu0 0
    %517 = vmatpush.bf16.xpose.msra.mxu0 0
    %518 = vmatpush.bf16.xpose.msra.mxu0 0
    %519 = vmatpush.bf16.xpose.msra.mxu0 0
    %520 = vmatpush.bf16.xpose.msra.mxu0 %v511
    %521 = vmatmul.bf16.gmra.mxu0 %v508
    %v522 = vpop.f32.mrf.mxu0
    %v523 = vadd.f32 0.0, %v522
    %v524 = vpop.f32.mrf.mxu0
    %525 = vdwg.mxu0
    %v527 = vsel %vm430, %v383, 0
    %v530 = vsel %vm430, %v423, 0
    %532 = vmatpush.bf16.xpose.msra.mxu0 0
    %533 = vmatpush.bf16.xpose.msra.mxu0 0
    %534 = vmatpush.bf16.xpose.msra.mxu0 0
    %535 = vmatpush.bf16.xpose.msra.mxu0 0
    %536 = vmatpush.bf16.xpose.msra.mxu0 0
    %537 = vmatpush.bf16.xpose.msra.mxu0 0
    %538 = vmatpush.bf16.xpose.msra.mxu0 0
    %539 = vmatpush.bf16.xpose.msra.mxu0 %v530
    %540 = vmatmul.bf16.gmra.mxu0 %v527
    %v541 = vpop.f32.mrf.mxu0
    %v542 = vadd.f32 0.0, %v541
    %v543 = vpop.f32.mrf.mxu0
    %544 = vdwg.mxu0
    %v546 = vsel %vm430, %v384, 0
    %v549 = vsel %vm430, %v424, 0
    %551 = vmatpush.bf16.xpose.msra.mxu0 0
    %552 = vmatpush.bf16.xpose.msra.mxu0 0
    %553 = vmatpush.bf16.xpose.msra.mxu0 0
    %554 = vmatpush.bf16.xpose.msra.mxu0 0
    %555 = vmatpush.bf16.xpose.msra.mxu0 0
    %556 = vmatpush.bf16.xpose.msra.mxu0 0
    %557 = vmatpush.bf16.xpose.msra.mxu0 0
    %558 = vmatpush.bf16.xpose.msra.mxu0 %v549
    %559 = vmatmul.bf16.gmra.mxu0 %v546
    %v560 = vpop.f32.mrf.mxu0
    %v561 = vadd.f32 0.0, %v560
    %v562 = vpop.f32.mrf.mxu0
    %563 = vdwg.mxu0
    %v565 = vsel %vm430, %v385, 0
    %v568 = vsel %vm430, %v425, 0
    %570 = vmatpush.bf16.xpose.msra.mxu0 0
    %571 = vmatpush.bf16.xpose.msra.mxu0 0
    %572 = vmatpush.bf16.xpose.msra.mxu0 0
    %573 = vmatpush.bf16.xpose.msra.mxu0 0
    %574 = vmatpush.bf16.xpose.msra.mxu0 0
    %575 = vmatpush.bf16.xpose.msra.mxu0 0
    %576 = vmatpush.bf16.xpose.msra.mxu0 0
    %577 = vmatpush.bf16.xpose.msra.mxu0 %v568
    %578 = vmatmul.bf16.gmra.mxu0 %v565
    %v579 = vpop.f32.mrf.mxu0
    %v580 = vadd.f32 0.0, %v579
    %v581 = vpop.f32.mrf.mxu0
    %582 = vdwg.mxu0
    %v584 = vsel %vm430, %v386, 0
    %v587 = vsel %vm430, %v426, 0
    %589 = vmatpush.bf16.xpose.msra.mxu0 0
    %590 = vmatpush.bf16.xpose.msra.mxu0 0
    %591 = vmatpush.bf16.xpose.msra.mxu0 0
    %592 = vmatpush.bf16.xpose.msra.mxu0 0
    %593 = vmatpush.bf16.xpose.msra.mxu0 0
    %594 = vmatpush.bf16.xpose.msra.mxu0 0
    %595 = vmatpush.bf16.xpose.msra.mxu0 0
    %596 = vmatpush.bf16.xpose.msra.mxu0 %v587
    %597 = vmatmul.bf16.gmra.mxu0 %v584
    %v598 = vpop.f32.mrf.mxu0
    %v599 = vadd.f32 0.0, %v598
    %v600 = vpop.f32.mrf.mxu0
    %601 = vdwg.mxu0
    %v603 = vsel %vm430, %v387, 0
    %v606 = vsel %vm430, %v427, 0
    %608 = vmatpush.bf16.xpose.msra.mxu0 0
    %609 = vmatpush.bf16.xpose.msra.mxu0 0
    %610 = vmatpush.bf16.xpose.msra.mxu0 0
    %611 = vmatpush.bf16.xpose.msra.mxu0 0
    %612 = vmatpush.bf16.xpose.msra.mxu0 0
    %613 = vmatpush.bf16.xpose.msra.mxu0 0
    %614 = vmatpush.bf16.xpose.msra.mxu0 0
    %615 = vmatpush.bf16.xpose.msra.mxu0 %v606
    %616 = vmatmul.bf16.gmra.mxu0 %v603
    %v617 = vpop.f32.mrf.mxu0
    %v618 = vadd.f32 0.0, %v617
    %v619 = vpop.f32.mrf.mxu0
    %620 = vdwg.mxu0
    %v622 = vsel %vm430, %v388, 0
    %v625 = vsel %vm430, %v428, 0
    %627 = vmatpush.bf16.xpose.msra.mxu0 0
    %628 = vmatpush.bf16.xpose.msra.mxu0 0
    %629 = vmatpush.bf16.xpose.msra.mxu0 0
    %630 = vmatpush.bf16.xpose.msra.mxu0 0
    %631 = vmatpush.bf16.xpose.msra.mxu0 0
    %632 = vmatpush.bf16.xpose.msra.mxu0 0
    %633 = vmatpush.bf16.xpose.msra.mxu0 0
    %634 = vmatpush.bf16.xpose.msra.mxu0 %v625
    %635 = vmatmul.bf16.gmra.mxu0 %v622
    %v636 = vpop.f32.mrf.mxu0
    %v637 = vadd.f32 0.0, %v636
    %v638 = vpop.f32.mrf.mxu0
    %639 = vdwg.mxu0
    %v641 = vsel %vm430, %v389, 0
    %v644 = vsel %vm430, %v429, 0
    %646 = vmatpush.bf16.xpose.msra.mxu0 0
    %647 = vmatpush.bf16.xpose.msra.mxu0 0
    %648 = vmatpush.bf16.xpose.msra.mxu0 0
    %649 = vmatpush.bf16.xpose.msra.mxu0 0
    %650 = vmatpush.bf16.xpose.msra.mxu0 0
    %651 = vmatpush.bf16.xpose.msra.mxu0 0
    %652 = vmatpush.bf16.xpose.msra.mxu0 0
    %653 = vmatpush.bf16.xpose.msra.mxu0 %v644
    %654 = vmatmul.bf16.gmra.mxu0 %v641
    %v655 = vpop.f32.mrf.mxu0
    %v656 = vadd.f32 0.0, %v655
    %v657 = vpop.f32.mrf.mxu0
    %658 = vdwg.mxu0
    %vm659 = vcmask 64512
    %v660 = vsel %vm659, %v447, -inf
    %661 = vmax.xlane.f32.xlu0 %v660
    %v662 = vpop.xlane.xlu0 %661
    %v663 = vsel %vm659, %v466, -inf
    %664 = vmax.xlane.f32.xlu0 %v663
    %v665 = vpop.xlane.xlu0 %664
    %v666 = vsel %vm659, %v485, -inf
    %667 = vmax.xlane.f32.xlu0 %v666
    %v668 = vpop.xlane.xlu0 %667
    %v669 = vsel %vm659, %v504, -inf
    %670 = vmax.xlane.f32.xlu0 %v669
    %v671 = vpop.xlane.xlu0 %670
    %v672 = vsel %vm659, %v523, -inf
    %673 = vmax.xlane.f32.xlu0 %v672
    %v674 = vpop.xlane.xlu0 %673
    %v675 = vsel %vm659, %v542, -inf
    %676 = vmax.xlane.f32.xlu0 %v675
    %v677 = vpop.xlane.xlu0 %676
    %v678 = vsel %vm659, %v561, -inf
    %679 = vmax.xlane.f32.xlu0 %v678
    %v680 = vpop.xlane.xlu0 %679
    %v681 = vsel %vm659, %v580, -inf
    %682 = vmax.xlane.f32.xlu0 %v681
    %v683 = vpop.xlane.xlu0 %682
    %v684 = vsel %vm659, %v599, -inf
    %685 = vmax.xlane.f32.xlu0 %v684
    %v686 = vpop.xlane.xlu0 %685
    %v687 = vsel %vm659, %v618, -inf
    %688 = vmax.xlane.f32.xlu0 %v687
    %v689 = vpop.xlane.xlu0 %688
    %v690 = vsel %vm659, %v637, -inf
    %691 = vmax.xlane.f32.xlu0 %v690
    %v692 = vpop.xlane.xlu0 %691
    %v693 = vsel %vm659, %v656, -inf
    %694 = vmax.xlane.f32.xlu0 %v693
    %v695 = vpop.xlane.xlu0 %694
    %v696 = vsub.f32 %v447, %v662
    %v697 = vsub.f32 %v466, %v665
    %v698 = vsub.f32 %v485, %v668
    %v699 = vsub.f32 %v504, %v671
    %v700 = vsub.f32 %v523, %v674
    %v701 = vsub.f32 %v542, %v677
    %v702 = vsub.f32 %v561, %v680
    %v703 = vsub.f32 %v580, %v683
    %v704 = vsub.f32 %v599, %v686
    %v705 = vsub.f32 %v618, %v689
    %v706 = vsub.f32 %v637, %v692
    %v707 = vsub.f32 %v656, %v695
    %v708 = vmul.f32 %v696, 1.442695
    %v709 = vpow.pop %v708
    %v710 = vmul.f32 %v697, 1.442695
    %v711 = vpow.pop %v710
    %v712 = vmul.f32 %v698, 1.442695
    %v713 = vpow.pop %v712
    %v714 = vmul.f32 %v699, 1.442695
    %v715 = vpow.pop %v714
    %v716 = vmul.f32 %v700, 1.442695
    %v717 = vpow.pop %v716
    %v718 = vmul.f32 %v701, 1.442695
    %v719 = vpow.pop %v718
    %v720 = vmul.f32 %v702, 1.442695
    %v721 = vpow.pop %v720
    %v722 = vmul.f32 %v703, 1.442695
    %v723 = vpow.pop %v722
    %v724 = vmul.f32 %v704, 1.442695
    %v725 = vpow.pop %v724
    %v726 = vmul.f32 %v705, 1.442695
    %v727 = vpow.pop %v726
    %v728 = vmul.f32 %v706, 1.442695
    %v729 = vpow.pop %v728
    %v730 = vmul.f32 %v707, 1.442695
    %v731 = vpow.pop %v730
    %v732 = vsel %vm659, %v709, 0.0
    %733 = vadd.xlane.f32.xlu0 %v732
    %v734 = vpop.xlane.xlu0 %733
    %v735 = vsel %vm659, %v711, 0.0
    %736 = vadd.xlane.f32.xlu0 %v735
    %v737 = vpop.xlane.xlu0 %736
    %v738 = vsel %vm659, %v713, 0.0
    %739 = vadd.xlane.f32.xlu0 %v738
    %v740 = vpop.xlane.xlu0 %739
    %v741 = vsel %vm659, %v715, 0.0
    %742 = vadd.xlane.f32.xlu0 %v741
    %v743 = vpop.xlane.xlu0 %742
    %v744 = vsel %vm659, %v717, 0.0
    %745 = vadd.xlane.f32.xlu0 %v744
    %v746 = vpop.xlane.xlu0 %745
    %v747 = vsel %vm659, %v719, 0.0
    %748 = vadd.xlane.f32.xlu0 %v747
    %v749 = vpop.xlane.xlu0 %748
    %v750 = vsel %vm659, %v721, 0.0
    %751 = vadd.xlane.f32.xlu0 %v750
    %v752 = vpop.xlane.xlu0 %751
    %v753 = vsel %vm659, %v723, 0.0
    %754 = vadd.xlane.f32.xlu0 %v753
    %v755 = vpop.xlane.xlu0 %754
    %v756 = vsel %vm659, %v725, 0.0
    %757 = vadd.xlane.f32.xlu0 %v756
    %v758 = vpop.xlane.xlu0 %757
    %v759 = vsel %vm659, %v727, 0.0
    %760 = vadd.xlane.f32.xlu0 %v759
    %v761 = vpop.xlane.xlu0 %760
    %v762 = vsel %vm659, %v729, 0.0
    %763 = vadd.xlane.f32.xlu0 %v762
    %v764 = vpop.xlane.xlu0 %763
    %v765 = vsel %vm659, %v731, 0.0
    %766 = vadd.xlane.f32.xlu0 %v765
    %v767 = vpop.xlane.xlu0 %766
    %v768 = vrcp.pop %v734
    %v769 = vrcp.pop %v737
    %v770 = vrcp.pop %v740
    %v771 = vrcp.pop %v743
    %v772 = vrcp.pop %v746
    %v773 = vrcp.pop %v749
    %v774 = vrcp.pop %v752
    %v775 = vrcp.pop %v755
    %v776 = vrcp.pop %v758
    %v777 = vrcp.pop %v761
    %v778 = vrcp.pop %v764
    %v779 = vrcp.pop %v767
    %v780 = vmul.f32 %v709, %v768
    %v781 = vmul.f32 %v711, %v769
    %v782 = vmul.f32 %v713, %v770
    %v783 = vmul.f32 %v715, %v771
    %v784 = vmul.f32 %v717, %v772
    %v785 = vmul.f32 %v719, %v773
    %v786 = vmul.f32 %v721, %v774
    %v787 = vmul.f32 %v723, %v775
    %v788 = vmul.f32 %v725, %v776
    %v789 = vmul.f32 %v727, %v777
    %v790 = vmul.f32 %v729, %v778
    %v791 = vmul.f32 %v731, %v779
    %v792 = vsel %vm659, %v780, 0.0
    %v793 = vrot.slane %v792, 4
    %v794 = vadd.f32 %v792, %v793
    %v795 = vrot.slane %v794, 2
    %v796 = vadd.f32 %v794, %v795
    %v797 = vrot.slane %v796, 1
    %v798 = vadd.f32 %v796, %v797
    %v799 = vsel %vm659, %v781, 0.0
    %v800 = vrot.slane %v799, 4
    %v801 = vadd.f32 %v799, %v800
    %v802 = vrot.slane %v801, 2
    %v803 = vadd.f32 %v801, %v802
    %v804 = vrot.slane %v803, 1
    %v805 = vadd.f32 %v803, %v804
    %v806 = vsel %vm659, %v782, 0.0
    %v807 = vrot.slane %v806, 4
    %v808 = vadd.f32 %v806, %v807
    %v809 = vrot.slane %v808, 2
    %v810 = vadd.f32 %v808, %v809
    %v811 = vrot.slane %v810, 1
    %v812 = vadd.f32 %v810, %v811
    %v813 = vsel %vm659, %v783, 0.0
    %v814 = vrot.slane %v813, 4
    %v815 = vadd.f32 %v813, %v814
    %v816 = vrot.slane %v815, 2
    %v817 = vadd.f32 %v815, %v816
    %v818 = vrot.slane %v817, 1
    %v819 = vadd.f32 %v817, %v818
    %v820 = vsel %vm659, %v784, 0.0
    %v821 = vrot.slane %v820, 4
    %v822 = vadd.f32 %v820, %v821
    %v823 = vrot.slane %v822, 2
    %v824 = vadd.f32 %v822, %v823
    %v825 = vrot.slane %v824, 1
    %v826 = vadd.f32 %v824, %v825
    %v827 = vsel %vm659, %v785, 0.0
    %v828 = vrot.slane %v827, 4
    %v829 = vadd.f32 %v827, %v828
    %v830 = vrot.slane %v829, 2
    %v831 = vadd.f32 %v829, %v830
    %v832 = vrot.slane %v831, 1
    %v833 = vadd.f32 %v831, %v832
    %v834 = vsel %vm659, %v786, 0.0
    %v835 = vrot.slane %v834, 4
    %v836 = vadd.f32 %v834, %v835
    %v837 = vrot.slane %v836, 2
    %v838 = vadd.f32 %v836, %v837
    %v839 = vrot.slane %v838, 1
    %v840 = vadd.f32 %v838, %v839
    %v841 = vsel %vm659, %v787, 0.0
    %v842 = vrot.slane %v841, 4
    %v843 = vadd.f32 %v841, %v842
    %v844 = vrot.slane %v843, 2
    %v845 = vadd.f32 %v843, %v844
    %v846 = vrot.slane %v845, 1
    %v847 = vadd.f32 %v845, %v846
    %v848 = vsel %vm659, %v788, 0.0
    %v849 = vrot.slane %v848, 4
    %v850 = vadd.f32 %v848, %v849
    %v851 = vrot.slane %v850, 2
    %v852 = vadd.f32 %v850, %v851
    %v853 = vrot.slane %v852, 1
    %v854 = vadd.f32 %v852, %v853
    %v855 = vsel %vm659, %v789, 0.0
    %v856 = vrot.slane %v855, 4
    %v857 = vadd.f32 %v855, %v856
    %v858 = vrot.slane %v857, 2
    %v859 = vadd.f32 %v857, %v858
    %v860 = vrot.slane %v859, 1
    %v861 = vadd.f32 %v859, %v860
    %v862 = vsel %vm659, %v790, 0.0
    %v863 = vrot.slane %v862, 4
    %v864 = vadd.f32 %v862, %v863
    %v865 = vrot.slane %v864, 2
    %v866 = vadd.f32 %v864, %v865
    %v867 = vrot.slane %v866, 1
    %v868 = vadd.f32 %v866, %v867
    %v869 = vsel %vm659, %v791, 0.0
    %v870 = vrot.slane %v869, 4
    %v871 = vadd.f32 %v869, %v870
    %v872 = vrot.slane %v871, 2
    %v873 = vadd.f32 %v871, %v872
    %v874 = vrot.slane %v873, 1
    %v875 = vadd.f32 %v873, %v874
    %v876 = vmul.f32 %v798, %v200
    %v877 = vmul.f32 %v805, %v200
    %v878 = vmul.f32 %v812, %v200
    %v879 = vmul.f32 %v819, %v200
    %v880 = vmul.f32 %v826, %v200
    %v881 = vmul.f32 %v833, %v200
    %v882 = vmul.f32 %v840, %v200
    %v883 = vmul.f32 %v847, %v200
    %v884 = vmul.f32 %v854, %v200
    %v885 = vmul.f32 %v861, %v200
    %v886 = vmul.f32 %v868, %v200
    %v887 = vmul.f32 %v875, %v200
    %888 = vrot.lane.b32.xlu0 %v314, 96
    %v889 = vpop.permute.xlu0 %888
    %v892 = vsel %vm659, %v876, 0
    %894 = vmatpush.msra.mxu0 0.0
    %895 = vmatpush.msra.mxu0 0.0
    %896 = vmatpush.msra.mxu0 0.0
    %897 = vmatpush.msra.mxu0 0.0
    %898 = vmatpush.msra.mxu0 0.0
    %899 = vmatpush.msra.mxu0 0.0
    %900 = vmatpush.msra.mxu0 0.0
    %901 = vmatpush.msra.mxu0 0.0
    %902 = vmatpush.msra.mxu0 0.0
    %903 = vmatpush.msra.mxu0 0.0
    %904 = vmatpush.msra.mxu0 0.0
    %905 = vmatpush.msra.mxu0 0.0
    %906 = vmatpush.msra.mxu0 0.0
    %907 = vmatpush.msra.mxu0 0.0
    %908 = vmatpush.msra.mxu0 0.0
    %909 = vmatpush.msra.mxu0 %v889
    %910 = vmatmul.f32.gmra.mxu0 %v892
    %v911 = vpop.f32.mrf.mxu0
    %v912 = vadd.f32 0.0, %v911
    %913 = vdwg.mxu0
    %914 = vrot.lane.b32.xlu0 %v316, 96
    %v915 = vpop.permute.xlu0 %914
    %v918 = vsel %vm659, %v877, 0
    %920 = vmatpush.msra.mxu0 0.0
    %921 = vmatpush.msra.mxu0 0.0
    %922 = vmatpush.msra.mxu0 0.0
    %923 = vmatpush.msra.mxu0 0.0
    %924 = vmatpush.msra.mxu0 0.0
    %925 = vmatpush.msra.mxu0 0.0
    %926 = vmatpush.msra.mxu0 0.0
    %927 = vmatpush.msra.mxu0 0.0
    %928 = vmatpush.msra.mxu0 0.0
    %929 = vmatpush.msra.mxu0 0.0
    %930 = vmatpush.msra.mxu0 0.0
    %931 = vmatpush.msra.mxu0 0.0
    %932 = vmatpush.msra.mxu0 0.0
    %933 = vmatpush.msra.mxu0 0.0
    %934 = vmatpush.msra.mxu0 0.0
    %935 = vmatpush.msra.mxu0 %v915
    %936 = vmatmul.f32.gmra.mxu0 %v918
    %v937 = vpop.f32.mrf.mxu0
    %v938 = vadd.f32 0.0, %v937
    %939 = vdwg.mxu0
    %940 = vrot.lane.b32.xlu0 %v393, 96
    %v941 = vpop.permute.xlu0 %940
    %v944 = vsel %vm659, %v878, 0
    %946 = vmatpush.msra.mxu0 0.0
    %947 = vmatpush.msra.mxu0 0.0
    %948 = vmatpush.msra.mxu0 0.0
    %949 = vmatpush.msra.mxu0 0.0
    %950 = vmatpush.msra.mxu0 0.0
    %951 = vmatpush.msra.mxu0 0.0
    %952 = vmatpush.msra.mxu0 0.0
    %953 = vmatpush.msra.mxu0 0.0
    %954 = vmatpush.msra.mxu0 0.0
    %955 = vmatpush.msra.mxu0 0.0
    %956 = vmatpush.msra.mxu0 0.0
    %957 = vmatpush.msra.mxu0 0.0
    %958 = vmatpush.msra.mxu0 0.0
    %959 = vmatpush.msra.mxu0 0.0
    %960 = vmatpush.msra.mxu0 0.0
    %961 = vmatpush.msra.mxu0 %v941
    %962 = vmatmul.f32.gmra.mxu0 %v944
    %v963 = vpop.f32.mrf.mxu0
    %v964 = vadd.f32 0.0, %v963
    %965 = vdwg.mxu0
    %966 = vrot.lane.b32.xlu0 %v395, 96
    %v967 = vpop.permute.xlu0 %966
    %v970 = vsel %vm659, %v879, 0
    %972 = vmatpush.msra.mxu0 0.0
    %973 = vmatpush.msra.mxu0 0.0
    %974 = vmatpush.msra.mxu0 0.0
    %975 = vmatpush.msra.mxu0 0.0
    %976 = vmatpush.msra.mxu0 0.0
    %977 = vmatpush.msra.mxu0 0.0
    %978 = vmatpush.msra.mxu0 0.0
    %979 = vmatpush.msra.mxu0 0.0
    %980 = vmatpush.msra.mxu0 0.0
    %981 = vmatpush.msra.mxu0 0.0
    %982 = vmatpush.msra.mxu0 0.0
    %983 = vmatpush.msra.mxu0 0.0
    %984 = vmatpush.msra.mxu0 0.0
    %985 = vmatpush.msra.mxu0 0.0
    %986 = vmatpush.msra.mxu0 0.0
    %987 = vmatpush.msra.mxu0 %v967
    %988 = vmatmul.f32.gmra.mxu0 %v970
    %v989 = vpop.f32.mrf.mxu0
    %v990 = vadd.f32 0.0, %v989
    %991 = vdwg.mxu0
    %992 = vrot.lane.b32.xlu0 %v342, 96
    %v993 = vpop.permute.xlu0 %992
    %v996 = vsel %vm659, %v880, 0
    %998 = vmatpush.msra.mxu0 0.0
    %999 = vmatpush.msra.mxu0 0.0
    %1000 = vmatpush.msra.mxu0 0.0
    %1001 = vmatpush.msra.mxu0 0.0
    %1002 = vmatpush.msra.mxu0 0.0
    %1003 = vmatpush.msra.mxu0 0.0
    %1004 = vmatpush.msra.mxu0 0.0
    %1005 = vmatpush.msra.mxu0 0.0
    %1006 = vmatpush.msra.mxu0 0.0
    %1007 = vmatpush.msra.mxu0 0.0
    %1008 = vmatpush.msra.mxu0 0.0
    %1009 = vmatpush.msra.mxu0 0.0
    %1010 = vmatpush.msra.mxu0 0.0
    %1011 = vmatpush.msra.mxu0 0.0
    %1012 = vmatpush.msra.mxu0 0.0
    %1013 = vmatpush.msra.mxu0 %v993
    %1014 = vmatmul.f32.gmra.mxu0 %v996
    %v1015 = vpop.f32.mrf.mxu0
    %v1016 = vadd.f32 0.0, %v1015
    %1017 = vdwg.mxu0
    %1018 = vrot.lane.b32.xlu0 %v344, 96
    %v1019 = vpop.permute.xlu0 %1018
    %v1022 = vsel %vm659, %v881, 0
    %1024 = vmatpush.msra.mxu0 0.0
    %1025 = vmatpush.msra.mxu0 0.0
    %1026 = vmatpush.msra.mxu0 0.0
    %1027 = vmatpush.msra.mxu0 0.0
    %1028 = vmatpush.msra.mxu0 0.0
    %1029 = vmatpush.msra.mxu0 0.0
    %1030 = vmatpush.msra.mxu0 0.0
    %1031 = vmatpush.msra.mxu0 0.0
    %1032 = vmatpush.msra.mxu0 0.0
    %1033 = vmatpush.msra.mxu0 0.0
    %1034 = vmatpush.msra.mxu0 0.0
    %1035 = vmatpush.msra.mxu0 0.0
    %1036 = vmatpush.msra.mxu0 0.0
    %1037 = vmatpush.msra.mxu0 0.0
    %1038 = vmatpush.msra.mxu0 0.0
    %1039 = vmatpush.msra.mxu0 %v1019
    %1040 = vmatmul.f32.gmra.mxu0 %v1022
    %v1041 = vpop.f32.mrf.mxu0
    %v1042 = vadd.f32 0.0, %v1041
    %1043 = vdwg.mxu0
    %1044 = vrot.lane.b32.xlu0 %v401, 96
    %v1045 = vpop.permute.xlu0 %1044
    %v1048 = vsel %vm659, %v882, 0
    %1050 = vmatpush.msra.mxu0 0.0
    %1051 = vmatpush.msra.mxu0 0.0
    %1052 = vmatpush.msra.mxu0 0.0
    %1053 = vmatpush.msra.mxu0 0.0
    %1054 = vmatpush.msra.mxu0 0.0
    %1055 = vmatpush.msra.mxu0 0.0
    %1056 = vmatpush.msra.mxu0 0.0
    %1057 = vmatpush.msra.mxu0 0.0
    %1058 = vmatpush.msra.mxu0 0.0
    %1059 = vmatpush.msra.mxu0 0.0
    %1060 = vmatpush.msra.mxu0 0.0
    %1061 = vmatpush.msra.mxu0 0.0
    %1062 = vmatpush.msra.mxu0 0.0
    %1063 = vmatpush.msra.mxu0 0.0
    %1064 = vmatpush.msra.mxu0 0.0
    %1065 = vmatpush.msra.mxu0 %v1045
    %1066 = vmatmul.f32.gmra.mxu0 %v1048
    %v1067 = vpop.f32.mrf.mxu0
    %v1068 = vadd.f32 0.0, %v1067
    %1069 = vdwg.mxu0
    %1070 = vrot.lane.b32.xlu0 %v403, 96
    %v1071 = vpop.permute.xlu0 %1070
    %v1074 = vsel %vm659, %v883, 0
    %1076 = vmatpush.msra.mxu0 0.0
    %1077 = vmatpush.msra.mxu0 0.0
    %1078 = vmatpush.msra.mxu0 0.0
    %1079 = vmatpush.msra.mxu0 0.0
    %1080 = vmatpush.msra.mxu0 0.0
    %1081 = vmatpush.msra.mxu0 0.0
    %1082 = vmatpush.msra.mxu0 0.0
    %1083 = vmatpush.msra.mxu0 0.0
    %1084 = vmatpush.msra.mxu0 0.0
    %1085 = vmatpush.msra.mxu0 0.0
    %1086 = vmatpush.msra.mxu0 0.0
    %1087 = vmatpush.msra.mxu0 0.0
    %1088 = vmatpush.msra.mxu0 0.0
    %1089 = vmatpush.msra.mxu0 0.0
    %1090 = vmatpush.msra.mxu0 0.0
    %1091 = vmatpush.msra.mxu0 %v1071
    %1092 = vmatmul.f32.gmra.mxu0 %v1074
    %v1093 = vpop.f32.mrf.mxu0
    %v1094 = vadd.f32 0.0, %v1093
    %1095 = vdwg.mxu0
    %1096 = vrot.lane.b32.xlu0 %v407, 96
    %v1097 = vpop.permute.xlu0 %1096
    %v1100 = vsel %vm659, %v884, 0
    %1102 = vmatpush.msra.mxu0 0.0
    %1103 = vmatpush.msra.mxu0 0.0
    %1104 = vmatpush.msra.mxu0 0.0
    %1105 = vmatpush.msra.mxu0 0.0
    %1106 = vmatpush.msra.mxu0 0.0
    %1107 = vmatpush.msra.mxu0 0.0
    %1108 = vmatpush.msra.mxu0 0.0
    %1109 = vmatpush.msra.mxu0 0.0
    %1110 = vmatpush.msra.mxu0 0.0
    %1111 = vmatpush.msra.mxu0 0.0
    %1112 = vmatpush.msra.mxu0 0.0
    %1113 = vmatpush.msra.mxu0 0.0
    %1114 = vmatpush.msra.mxu0 0.0
    %1115 = vmatpush.msra.mxu0 0.0
    %1116 = vmatpush.msra.mxu0 0.0
    %1117 = vmatpush.msra.mxu0 %v1097
    %1118 = vmatmul.f32.gmra.mxu0 %v1100
    %v1119 = vpop.f32.mrf.mxu0
    %v1120 = vadd.f32 0.0, %v1119
    %1121 = vdwg.mxu0
    %1122 = vrot.lane.b32.xlu0 %v409, 96
    %v1123 = vpop.permute.xlu0 %1122
    %v1126 = vsel %vm659, %v885, 0
    %1128 = vmatpush.msra.mxu0 0.0
    %1129 = vmatpush.msra.mxu0 0.0
    %1130 = vmatpush.msra.mxu0 0.0
    %1131 = vmatpush.msra.mxu0 0.0
    %1132 = vmatpush.msra.mxu0 0.0
    %1133 = vmatpush.msra.mxu0 0.0
    %1134 = vmatpush.msra.mxu0 0.0
    %1135 = vmatpush.msra.mxu0 0.0
    %1136 = vmatpush.msra.mxu0 0.0
    %1137 = vmatpush.msra.mxu0 0.0
    %1138 = vmatpush.msra.mxu0 0.0
    %1139 = vmatpush.msra.mxu0 0.0
    %1140 = vmatpush.msra.mxu0 0.0
    %1141 = vmatpush.msra.mxu0 0.0
    %1142 = vmatpush.msra.mxu0 0.0
    %1143 = vmatpush.msra.mxu0 %v1123
    %1144 = vmatmul.f32.gmra.mxu0 %v1126
    %v1145 = vpop.f32.mrf.mxu0
    %v1146 = vadd.f32 0.0, %v1145
    %1147 = vdwg.mxu0
    %1148 = vrot.lane.b32.xlu0 %v413, 96
    %v1149 = vpop.permute.xlu0 %1148
    %v1152 = vsel %vm659, %v886, 0
    %1154 = vmatpush.msra.mxu0 0.0
    %1155 = vmatpush.msra.mxu0 0.0
    %1156 = vmatpush.msra.mxu0 0.0
    %1157 = vmatpush.msra.mxu0 0.0
    %1158 = vmatpush.msra.mxu0 0.0
    %1159 = vmatpush.msra.mxu0 0.0
    %1160 = vmatpush.msra.mxu0 0.0
    %1161 = vmatpush.msra.mxu0 0.0
    %1162 = vmatpush.msra.mxu0 0.0
    %1163 = vmatpush.msra.mxu0 0.0
    %1164 = vmatpush.msra.mxu0 0.0
    %1165 = vmatpush.msra.mxu0 0.0
    %1166 = vmatpush.msra.mxu0 0.0
    %1167 = vmatpush.msra.mxu0 0.0
    %1168 = vmatpush.msra.mxu0 0.0
    %1169 = vmatpush.msra.mxu0 %v1149
    %1170 = vmatmul.f32.gmra.mxu0 %v1152
    %v1171 = vpop.f32.mrf.mxu0
    %v1172 = vadd.f32 0.0, %v1171
    %1173 = vdwg.mxu0
    %1174 = vrot.lane.b32.xlu0 %v415, 96
    %v1175 = vpop.permute.xlu0 %1174
    %v1178 = vsel %vm659, %v887, 0
    %1180 = vmatpush.msra.mxu0 0.0
    %1181 = vmatpush.msra.mxu0 0.0
    %1182 = vmatpush.msra.mxu0 0.0
    %1183 = vmatpush.msra.mxu0 0.0
    %1184 = vmatpush.msra.mxu0 0.0
    %1185 = vmatpush.msra.mxu0 0.0
    %1186 = vmatpush.msra.mxu0 0.0
    %1187 = vmatpush.msra.mxu0 0.0
    %1188 = vmatpush.msra.mxu0 0.0
    %1189 = vmatpush.msra.mxu0 0.0
    %1190 = vmatpush.msra.mxu0 0.0
    %1191 = vmatpush.msra.mxu0 0.0
    %1192 = vmatpush.msra.mxu0 0.0
    %1193 = vmatpush.msra.mxu0 0.0
    %1194 = vmatpush.msra.mxu0 0.0
    %1195 = vmatpush.msra.mxu0 %v1175
    %1196 = vmatmul.f32.gmra.mxu0 %v1178
    %v1197 = vpop.f32.mrf.mxu0
    %v1198 = vadd.f32 0.0, %v1197
    %1199 = vdwg.mxu0
    %v1202 = vrot.slane %v938, 7
    %v1203 = vsel %vm213, %v1202, %v912
    %v1207 = vrot.slane %v990, 7
    %v1208 = vsel %vm213, %v1207, %v964
    %1209 = vrot.lane.b32.xlu0 %v1208, 16
    %v1210 = vpop.permute.xlu0 %1209
    %v1212 = vsel %vm430, %v1203, %v1210
    %v1215 = vrot.slane %v1042, 7
    %v1216 = vsel %vm213, %v1215, %v1016
    %v1220 = vrot.slane %v1094, 7
    %v1221 = vsel %vm213, %v1220, %v1068
    %1222 = vrot.lane.b32.xlu0 %v1221, 16
    %v1223 = vpop.permute.xlu0 %1222
    %v1225 = vsel %vm430, %v1216, %v1223
    %v1228 = vrot.slane %v1146, 7
    %v1229 = vsel %vm213, %v1228, %v1120
    %v1233 = vrot.slane %v1198, 7
    %v1234 = vsel %vm213, %v1233, %v1172
    %1235 = vrot.lane.b32.xlu0 %v1234, 16
    %v1236 = vpop.permute.xlu0 %1235
    %v1238 = vsel %vm430, %v1229, %v1236
    %v1239 = vpack.c.bf16 %v1212, %v1212
    %v1240 = vpack.c.bf16 %v1225, %v1225
    %v1241 = vpack.c.bf16 %v1238, %v1238
    %v1242 = vld [vmem:[#allocation11] sm:$0xff]
    %v1243 = vld [vmem:[#allocation11 + $0x8] sm:$0xff]
    %v1244 = vld [vmem:[#allocation11 + $0x10] sm:$0xff]
    %v1245 = vld [vmem:[#allocation11 + $0x18] sm:$0xff]
    %v1246 = vld [vmem:[#allocation11 + $0x20] sm:$0xff]
    %v1247 = vld [vmem:[#allocation11 + $0x28] sm:$0xff]
    %v1248 = vld [vmem:[#allocation11 + $0x30] sm:$0xff]
    %v1249 = vld [vmem:[#allocation11 + $0x38] sm:$0xff]
    %v1250 = vld [vmem:[#allocation11 + $0x40] sm:$0xff]
    %v1251 = vld [vmem:[#allocation11 + $0x48] sm:$0xff]
    %v1252 = vld [vmem:[#allocation11 + $0x50] sm:$0xff]
    %v1253 = vld [vmem:[#allocation11 + $0x58] sm:$0xff]
    %v1254 = vpack.c.bf16 %v1242, %v1242
    %v1255 = vpack.c.bf16 %v1243, %v1243
    %v1256 = vpack.c.bf16 %v1244, %v1244
    %v1257 = vpack.c.bf16 %v1245, %v1245
    %v1258 = vpack.c.bf16 %v1246, %v1246
    %v1259 = vpack.c.bf16 %v1247, %v1247
    %v1260 = vpack.c.bf16 %v1248, %v1248
    %v1261 = vpack.c.bf16 %v1249, %v1249
    %v1262 = vpack.c.bf16 %v1250, %v1250
    %v1263 = vpack.c.bf16 %v1251, %v1251
    %v1264 = vpack.c.bf16 %v1252, %v1252
    %v1265 = vpack.c.bf16 %v1253, %v1253
    %v1266 = vld [vmem:[%s8] sm:$0x1]
    %v1267 = vld [vmem:[%s8 + $0x1] sm:$0x1]
    %v1268 = vld [vmem:[%s8 + $0x2] sm:$0x1]
    %v1272 = vperm.slane %v1266, 0
    %v1273 = vperm.slane %v1267, 0
    %v1274 = vperm.slane %v1268, 0
    %v1282 = vunpack.c.l.b16 %v1254
    %v1283 = vunpack.c.l.b16 %v1255
    %v1284 = vunpack.c.l.b16 %v1256
    %v1285 = vunpack.c.l.b16 %v1257
    %v1286 = vpack.c.b16 %v1283, %v1282
    %v1287 = vpack.c.b16 %v1285, %v1284
    %v1291 = vsel %vm179, %v1239, 0
    %1293 = vmatpush.bf16.msra.mxu0 0
    %1294 = vmatpush.bf16.msra.mxu0 0
    %1295 = vmatpush.bf16.msra.mxu0 0
    %1296 = vmatpush.bf16.msra.mxu0 0
    %1297 = vmatpush.bf16.msra.mxu0 0
    %1298 = vmatpush.bf16.msra.mxu0 0
    %1299 = vmatpush.bf16.msra.mxu0 %v1287
    %1300 = vmatpush.bf16.msra.mxu0 %v1286
    %1301 = vmatmul.bf16.gmra.mxu0 %v1291
    %v1302 = vpop.f32.mrf.mxu0
    %v1303 = vadd.f32 %v1272, %v1302
    %v1304 = vpop.f32.mrf.mxu0
    %1305 = vdwg.mxu0
    %v1310 = vunpack.c.l.b16 %v1258
    %v1311 = vunpack.c.l.b16 %v1259
    %v1312 = vunpack.c.l.b16 %v1260
    %v1313 = vunpack.c.l.b16 %v1261
    %v1314 = vpack.c.b16 %v1311, %v1310
    %v1315 = vpack.c.b16 %v1313, %v1312
    %v1319 = vsel %vm179, %v1240, 0
    %1321 = vmatpush.bf16.msra.mxu0 0
    %1322 = vmatpush.bf16.msra.mxu0 0
    %1323 = vmatpush.bf16.msra.mxu0 0
    %1324 = vmatpush.bf16.msra.mxu0 0
    %1325 = vmatpush.bf16.msra.mxu0 0
    %1326 = vmatpush.bf16.msra.mxu0 0
    %1327 = vmatpush.bf16.msra.mxu0 %v1315
    %1328 = vmatpush.bf16.msra.mxu0 %v1314
    %1329 = vmatmul.bf16.gmra.mxu0 %v1319
    %v1330 = vpop.f32.mrf.mxu0
    %v1331 = vadd.f32 %v1273, %v1330
    %v1332 = vpop.f32.mrf.mxu0
    %1333 = vdwg.mxu0
    %v1338 = vunpack.c.l.b16 %v1262
    %v1339 = vunpack.c.l.b16 %v1263
    %v1340 = vunpack.c.l.b16 %v1264
    %v1341 = vunpack.c.l.b16 %v1265
    %v1342 = vpack.c.b16 %v1339, %v1338
    %v1343 = vpack.c.b16 %v1341, %v1340
    %v1347 = vsel %vm179, %v1241, 0
    %1349 = vmatpush.bf16.msra.mxu0 0
    %1350 = vmatpush.bf16.msra.mxu0 0
    %1351 = vmatpush.bf16.msra.mxu0 0
    %1352 = vmatpush.bf16.msra.mxu0 0
    %1353 = vmatpush.bf16.msra.mxu0 0
    %1354 = vmatpush.bf16.msra.mxu0 0
    %1355 = vmatpush.bf16.msra.mxu0 %v1343
    %1356 = vmatpush.bf16.msra.mxu0 %v1342
    %1357 = vmatmul.bf16.gmra.mxu0 %v1347
    %v1358 = vpop.f32.mrf.mxu0
    %v1359 = vadd.f32 %v1274, %v1358
    %v1360 = vpop.f32.mrf.mxu0
    %1361 = vdwg.mxu0
    %v1362 = vpack.c.bf16 %v1303, %v1303
    %v1363 = vpack.c.bf16 %v1331, %v1331
    %v1364 = vpack.c.bf16 %v1359, %v1359
    %v1365 = vld [vmem:[#allocation13] sm:$0xff]
    %v1366 = vld [vmem:[#allocation13 + $0x8] sm:$0xff]
    %v1367 = vld [vmem:[#allocation13 + $0x10] sm:$0xff]
    %v1368 = vld [vmem:[#allocation13 + $0x18] sm:$0xff]
    %v1369 = vld [vmem:[#allocation13 + $0x20] sm:$0xff]
    %v1370 = vld [vmem:[#allocation13 + $0x28] sm:$0xff]
    %v1371 = vld [vmem:[#allocation13 + $0x30] sm:$0xff]
    %v1372 = vld [vmem:[#allocation13 + $0x38] sm:$0xff]
    %v1373 = vld [vmem:[#allocation13 + $0x40] sm:$0xff]
    %v1374 = vld [vmem:[#allocation13 + $0x48] sm:$0xff]
    %v1375 = vld [vmem:[#allocation13 + $0x50] sm:$0xff]
    %v1376 = vld [vmem:[#allocation13 + $0x58] sm:$0xff]
    %v1377 = vpack.c.bf16 %v1365, %v1365
    %v1378 = vpack.c.bf16 %v1366, %v1366
    %v1379 = vpack.c.bf16 %v1367, %v1367
    %v1380 = vpack.c.bf16 %v1368, %v1368
    %v1381 = vpack.c.bf16 %v1369, %v1369
    %v1382 = vpack.c.bf16 %v1370, %v1370
    %v1383 = vpack.c.bf16 %v1371, %v1371
    %v1384 = vpack.c.bf16 %v1372, %v1372
    %v1385 = vpack.c.bf16 %v1373, %v1373
    %v1386 = vpack.c.bf16 %v1374, %v1374
    %v1387 = vpack.c.bf16 %v1375, %v1375
    %v1388 = vpack.c.bf16 %v1376, %v1376
    %v1389 = vld [vmem:[%s10] sm:$0x1]
    %v1390 = vld [vmem:[%s10 + $0x1] sm:$0x1]
    %v1391 = vld [vmem:[%s10 + $0x2] sm:$0x1]
    %v1395 = vperm.slane %v1389, 0
    %v1396 = vperm.slane %v1390, 0
    %v1397 = vperm.slane %v1391, 0
    %v1405 = vunpack.c.l.b16 %v1377
    %v1406 = vunpack.c.l.b16 %v1378
    %v1407 = vunpack.c.l.b16 %v1379
    %v1408 = vunpack.c.l.b16 %v1380
    %v1409 = vpack.c.b16 %v1406, %v1405
    %v1410 = vpack.c.b16 %v1408, %v1407
    %v1414 = vsel %vm179, %v1362, 0
    %1416 = vmatpush.bf16.msra.mxu0 0
    %1417 = vmatpush.bf16.msra.mxu0 0
    %1418 = vmatpush.bf16.msra.mxu0 0
    %1419 = vmatpush.bf16.msra.mxu0 0
    %1420 = vmatpush.bf16.msra.mxu0 0
    %1421 = vmatpush.bf16.msra.mxu0 0
    %1422 = vmatpush.bf16.msra.mxu0 %v1410
    %1423 = vmatpush.bf16.msra.mxu0 %v1409
    %1424 = vmatmul.bf16.gmra.mxu0 %v1414
    %v1425 = vpop.f32.mrf.mxu0
    %v1426 = vadd.f32 %v1395, %v1425
    %v1427 = vpop.f32.mrf.mxu0
    %1428 = vdwg.mxu0
    %v1433 = vunpack.c.l.b16 %v1381
    %v1434 = vunpack.c.l.b16 %v1382
    %v1435 = vunpack.c.l.b16 %v1383
    %v1436 = vunpack.c.l.b16 %v1384
    %v1437 = vpack.c.b16 %v1434, %v1433
    %v1438 = vpack.c.b16 %v1436, %v1435
    %v1442 = vsel %vm179, %v1363, 0
    %1444 = vmatpush.bf16.msra.mxu0 0
    %1445 = vmatpush.bf16.msra.mxu0 0
    %1446 = vmatpush.bf16.msra.mxu0 0
    %1447 = vmatpush.bf16.msra.mxu0 0
    %1448 = vmatpush.bf16.msra.mxu0 0
    %1449 = vmatpush.bf16.msra.mxu0 0
    %1450 = vmatpush.bf16.msra.mxu0 %v1438
    %1451 = vmatpush.bf16.msra.mxu0 %v1437
    %1452 = vmatmul.bf16.gmra.mxu0 %v1442
    %v1453 = vpop.f32.mrf.mxu0
    %v1454 = vadd.f32 %v1396, %v1453
    %v1455 = vpop.f32.mrf.mxu0
    %1456 = vdwg.mxu0
    %v1461 = vunpack.c.l.b16 %v1385
    %v1462 = vunpack.c.l.b16 %v1386
    %v1463 = vunpack.c.l.b16 %v1387
    %v1464 = vunpack.c.l.b16 %v1388
    %v1465 = vpack.c.b16 %v1462, %v1461
    %v1466 = vpack.c.b16 %v1464, %v1463
    %v1470 = vsel %vm179, %v1364, 0
    %1472 = vmatpush.bf16.msra.mxu0 0
    %1473 = vmatpush.bf16.msra.mxu0 0
    %1474 = vmatpush.bf16.msra.mxu0 0
    %1475 = vmatpush.bf16.msra.mxu0 0
    %1476 = vmatpush.bf16.msra.mxu0 0
    %1477 = vmatpush.bf16.msra.mxu0 0
    %1478 = vmatpush.bf16.msra.mxu0 %v1466
    %1479 = vmatpush.bf16.msra.mxu0 %v1465
    %1480 = vmatmul.bf16.gmra.mxu0 %v1470
    %v1481 = vpop.f32.mrf.mxu0
    %v1482 = vadd.f32 %v1397, %v1481
    %v1483 = vpop.f32.mrf.mxu0
    %1484 = vdwg.mxu0
    %1486 = vset.pattern.permute.xlu0 0
    %1487 = vperm.xlu0 %1486, %v261
    %v1488 = vpop.permute.xlu0 %1487
    %v1490 = vmul.f32 %v1488, %v1426
    %1491 = vset.pattern.permute.xlu0 1
    %1492 = vperm.xlu0 %1491, %v261
    %v1493 = vpop.permute.xlu0 %1492
    %v1495 = vmul.f32 %v1493, %v1454
    %v1496 = vadd.f32 %v1490, %v1495
    %1497 = vset.pattern.permute.xlu0 2
    %1498 = vperm.xlu0 %1497, %v261
    %v1499 = vpop.permute.xlu0 %1498
    %v1501 = vmul.f32 %v1499, %v1482
    %v1502 = vadd.f32 %v1496, %v1501
    %v1503 = vld [vmem:[#allocation14] sm:$0xff]
    %v1504 = vld [vmem:[#allocation14 + $0x8] sm:$0xff]
    %v1505 = vld [vmem:[#allocation14 + $0x10] sm:$0xff]
    %v1506 = vld [vmem:[#allocation14 + $0x18] sm:$0xff]
    %v1507 = vpack.c.bf16 %v1502, %v1502
    %v1508 = vpack.c.bf16 %v1504, %v1503
    %v1509 = vpack.c.bf16 %v1506, %v1505
    %v1510 = vld [vmem:[%s14] sm:$0x1]
    %v1512 = vperm.slane %v1510, 0
    %v1515 = vsel %vm179, %v1507, 0
    %1517 = vmatpush.bf16.msra.mxu0 0
    %1518 = vmatpush.bf16.msra.mxu0 0
    %1519 = vmatpush.bf16.msra.mxu0 0
    %1520 = vmatpush.bf16.msra.mxu0 0
    %1521 = vmatpush.bf16.msra.mxu0 0
    %1522 = vmatpush.bf16.msra.mxu0 0
    %1523 = vmatpush.bf16.msra.mxu0 %v1509
    %1524 = vmatpush.bf16.msra.mxu0 %v1508
    %1525 = vmatmul.bf16.gmra.mxu0 %v1515
    %v1526 = vpop.f32.mrf.mxu0
    %v1527 = vadd.f32 %v1512, %v1526
    %v1528 = vpop.f32.mrf.mxu0
    %1529 = vdwg.mxu0
    %1530 = vst [vmem:[#allocation16] sm:$0x3] %v1527
    // Predicated region
    $region94: #{tpu_custom_call.1} parent=1 // pred_check
      _
    $region95: #{tpu_custom_call.1} parent=1 // pred_check_branch
      %1532 = sbr.rel (0) target = $region97
    $region96: #{tpu_custom_call.1} parent=1 // pred_region
      %1534 = vsyncadd [#allocation4], 0
      %s1536 = sshll.u32 [#allocation16], 4
      %s1537 = int_to_ptr.vmem [resolvable:$true] %s1536
      %s1538 = sshll.u32 %s15, 4
      %s1539 = int_to_ptr.hbm [resolvable:$true] %s1538
      %1541 = dma.vmem_to_hbm [thread:$0]  %s1537, 32, %s1539, [#allocation4]
    $region97: #{tpu_custom_call.1} parent=1 // pred_fallthru
      _
    // Predicated region
    $region98: #{tpu_custom_call.1} parent=1 // pred_check
      _
    $region99: #{tpu_custom_call.1} parent=1 // pred_check_branch
      %1543 = sbr.rel (0) target = $region101
    $region100: #{tpu_custom_call.1} parent=1 // pred_region
      %1545 = dma.done [#allocation4], 32
    $region101: #{tpu_custom_call.1} parent=1 // pred_fallthru
      _
    %1546 = vsyncpa [#allocation3], 1
    %1547 = vsyncpa [#allocation6], 1
    %1548 = vsyncpa [#allocation9], 1
    %1549 = vsyncpa [#allocation12], 1
    %1550 = vsyncpa [#allocation15], 1
    %1551 = vsyncpa [#allocation4], 1

</llo_original>
